<compile_context>
chip_gen: v6e
topology: v6e:2x2x1
jax: 0.10.0
libtpu: 0.0.40
codegen_flags: <defaults>
</compile_context>

<pallas_src>
import functools

import jax
import jax.numpy as jnp
from jax import lax
from jax.experimental import pallas as pl
from jax.experimental.pallas import tpu as pltpu

KH = KW = 3
NEG_SLOPE = 0.2


def _recon_kernel(x_ref, w1_ref, w2_ref, w3_ref, b1_ref, b2_ref, b3_ref,
                  o_ref, *, H, W):
    S = H * W
    # Column index of each lane.  The two horizontal-tap validity masks are
    # built once here and reused by all three layers (hoisted out of conv3x3).
    w_idx = lax.broadcasted_iota(jnp.int32, (1, S), 1) % W
    valid_left = w_idx >= 1            # source column w-1 exists
    valid_right = w_idx <= W - 2       # source column w+1 exists

    def lane_shift(x, off):
        # Static lane shift by `off` with zero fill (no wrap-around).
        if off == 0:
            return x
        c = x.shape[0]
        if off > 0:
            return jnp.concatenate(
                [x[:, off:], jnp.zeros((c, off), x.dtype)], axis=1)
        return jnp.concatenate(
            [jnp.zeros((c, -off), x.dtype), x[:, :off]], axis=1)

    def conv3x3(x, w_flat, b):
        # x: (Cin, S) bf16, w_flat: (Cout, 9*Cin) bf16, b: (Cout, 1) f32.
        # One MXU matmul per layer: the 9 taps are folded into K = 9*Cin.
        zeros = jnp.zeros_like(x)
        # Horizontal preparation depends only on dw: 2 shifts + 2 selects.
        h_taps = (
            jnp.where(valid_left, lane_shift(x, -1), zeros),   # dw = -1
            x,                                                 # dw =  0
            jnp.where(valid_right, lane_shift(x, +1), zeros),  # dw = +1
        )
        # Vertical taps are pure lane shifts by +-W with zero fill; they cannot
        # wrap columns because the shift distance is exactly one image row.
        patch = jnp.concatenate(
            [lane_shift(h_taps[kw], (kh - 1) * W)
             for kh in range(KH) for kw in range(KW)], axis=0)
        acc = jnp.dot(w_flat, patch, preferred_element_type=jnp.float32)
        return acc + b

    x = x_ref[0]                                          # (64, S) bf16
    y = conv3x3(x, w1_ref[...], b1_ref[...])              # (64, S) f32
    y = jnp.maximum(y, NEG_SLOPE * y).astype(jnp.bfloat16)
    y = conv3x3(y, w2_ref[...], b2_ref[...])              # (32, S) f32
    y = jnp.maximum(y, NEG_SLOPE * y).astype(jnp.bfloat16)
    y = conv3x3(y, w3_ref[...], b3_ref[...])              # (8, S) f32 (row 0 valid)
    o_ref[...] = y[0:1, :].reshape(1, 1, S)


def recon_forward(x_nchw, w1, b1, w2, b2, w3, b3):
    """Recon forward: conv(64->64)+lrelu, conv(64->32)+lrelu, conv(32->1).

    x_nchw: (N, 64, H, W) f32, weights in PyTorch OIHW layout, biases (Cout,).
    Returns (N, 1, H, W) f32.
    """
    N, C0, H, W = x_nchw.shape
    S = H * W
    C1, C2, C3 = w1.shape[0], w2.shape[0], w3.shape[0]
    C3P = 8  # pad final Cout=1 up to a full sublane tile for aligned MXU/store

    # Trace-time parameter plumbing on tiny tensors: OIHW -> (O, 9*I) bf16,
    # column order ((kh*KW + kw)*I + i) matching the in-kernel patch build.
    def flatten_w(w):
        o, i, kh, kw = w.shape
        return (jnp.transpose(w, (0, 2, 3, 1))
                .reshape(o, kh * kw * i).astype(jnp.bfloat16))

    xf = x_nchw.reshape(N, C0, S).astype(jnp.bfloat16)    # free reshape, bf16 DMA
    w1f = flatten_w(w1)
    w2f = flatten_w(w2)
    w3f = jnp.zeros((C3P, KH * KW * C2), jnp.bfloat16).at[:C3].set(flatten_w(w3))
    b1c = b1.reshape(C1, 1).astype(jnp.float32)
    b2c = b2.reshape(C2, 1).astype(jnp.float32)
    b3c = jnp.zeros((C3P, 1), jnp.float32).at[:C3].set(b3.reshape(C3, 1))

    kernel = functools.partial(_recon_kernel, H=H, W=W)
    # NOTE: for much larger H*W, add a spatial-tile grid axis with a 1-row halo
    # so double-buffered blocks stay within v7x's smaller VMEM.
    out = pl.pallas_call(
        kernel,
        out_shape=jax.ShapeDtypeStruct((N, 1, S), jnp.float32),
        grid_spec=pltpu.PrefetchScalarGridSpec(
            num_scalar_prefetch=0,
            grid=(N,),
            in_specs=[
                pl.BlockSpec((1, C0, S), lambda n: (n, 0, 0)),
                pl.BlockSpec((C1, KH * KW * C0), lambda n: (0, 0)),
                pl.BlockSpec((C2, KH * KW * C1), lambda n: (0, 0)),
                pl.BlockSpec((C3P, KH * KW * C2), lambda n: (0, 0)),
                pl.BlockSpec((C1, 1), lambda n: (0, 0)),
                pl.BlockSpec((C2, 1), lambda n: (0, 0)),
                pl.BlockSpec((C3P, 1), lambda n: (0, 0)),
            ],
            out_specs=pl.BlockSpec((1, 1, S), lambda n: (n, 0, 0)),
        ),
        compiler_params=pltpu.CompilerParams(
            dimension_semantics=("parallel",)),
    )(xf, w1f, w2f, w3f, b1c, b2c, b3c)
    return out.reshape(N, 1, H, W)


if __name__ == "__main__":
    # Small shapes consistent with the module: N=2, Cin=64, H=W=16.
    N, C0, H, W = 2, 64, 16, 16
    C1, C2, C3 = 64, 32, 1

    key = jax.random.PRNGKey(0)
    keys = jax.random.split(key, 7)

    def conv_init(kw_key, kb_key, cout, cin):
        fan_in = cin * KH * KW
        bound = fan_in ** -0.5
        w = jax.random.uniform(kw_key, (cout, cin, KH, KW),
                               minval=-bound, maxval=bound, dtype=jnp.float32)
        b = jax.random.uniform(kb_key, (cout,),
                               minval=-bound, maxval=bound, dtype=jnp.float32)
        return w, b

    x = jax.random.normal(keys[0], (N, C0, H, W), dtype=jnp.float32)
    w1, b1 = conv_init(keys[1], keys[2], C1, C0)
    w2, b2 = conv_init(keys[3], keys[4], C2, C1)
    w3, b3 = conv_init(keys[5], keys[6], C3, C2)

    out = recon_forward(x, w1, b1, w2, b2, w3, b3)
    out = jax.block_until_ready(out)

    # Reference: XLA convs with the same bf16 quantization of inputs/weights
    # and of the intermediate activations that the kernel applies.
    def q(a):
        return a.astype(jnp.bfloat16).astype(jnp.float32)

    def ref_conv(h, w, b):
        y = jax.lax.conv_general_dilated(
            q(h), q(w), window_strides=(1, 1), padding="SAME",
            dimension_numbers=("NCHW", "OIHW", "NCHW"))
        return y + b.reshape(1, -1, 1, 1)

    r = ref_conv(x, w1, b1)
    r = jnp.maximum(r, NEG_SLOPE * r)
    r = ref_conv(r, w2, b2)
    r = jnp.maximum(r, NEG_SLOPE * r)
    r = ref_conv(r, w3, b3)

    assert out.shape == (N, 1, H, W)
    max_err = float(jnp.max(jnp.abs(out - r)))
    assert jnp.allclose(out, r, atol=2e-2, rtol=2e-2), max_err
    print("KERNEL_OK")
</pallas_src>

<mosaic_0001>
module attributes {stable_mosaic.version = 11 : i64} {
  func.func @_recon_kernel(%arg0: i32, %arg1: memref<1x64x256xbf16, #tpu.memory_space<vmem>>, %arg2: memref<64x576xbf16, #tpu.memory_space<vmem>>, %arg3: memref<32x576xbf16, #tpu.memory_space<vmem>>, %arg4: memref<8x288xbf16, #tpu.memory_space<vmem>>, %arg5: memref<64x1xf32, #tpu.memory_space<vmem>>, %arg6: memref<32x1xf32, #tpu.memory_space<vmem>>, %arg7: memref<8x1xf32, #tpu.memory_space<vmem>>, %arg8: memref<1x1x256xf32, #tpu.memory_space<vmem>>) attributes {dimension_semantics = [#tpu.dimension_semantics<parallel>], iteration_bounds = array<i64: 2>, scalar_prefetch = 0 : i64, scratch_operands = 0 : i64, tpu.core_type = #tpu.core_type<tc>, window_params = [{transform_indices = @transform_0, window_bounds = array<i64: 1, 64, 256>}, {pipeline_mode = #tpu.pipeline_mode<synchronous>, transform_indices = @transform_1, window_bounds = array<i64: 64, 576>}, {pipeline_mode = #tpu.pipeline_mode<synchronous>, transform_indices = @transform_2, window_bounds = array<i64: 32, 576>}, {pipeline_mode = #tpu.pipeline_mode<synchronous>, transform_indices = @transform_3, window_bounds = array<i64: 8, 288>}, {pipeline_mode = #tpu.pipeline_mode<synchronous>, transform_indices = @transform_4, window_bounds = array<i64: 64, 1>}, {pipeline_mode = #tpu.pipeline_mode<synchronous>, transform_indices = @transform_5, window_bounds = array<i64: 32, 1>}, {pipeline_mode = #tpu.pipeline_mode<synchronous>, transform_indices = @transform_6, window_bounds = array<i64: 8, 1>}, {transform_indices = @transform_7, window_bounds = array<i64: 1, 1, 256>}]} {
    %0 = tpu.iota {dimensions = array<i32: 1>} : vector<1x256xi32>
    %c16_i32 = arith.constant 16 : i32
    %c0_i32 = arith.constant 0 : i32
    %1 = arith.cmpi eq, %c16_i32, %c0_i32 : i32
    %c1_i32 = arith.constant 1 : i32
    %2 = arith.select %1, %c1_i32, %c16_i32 : i32
    %3 = vector.broadcast %2 : i32 to vector<1x256xi32>
    %4 = arith.remsi %0, %3 : vector<1x256xi32>
    %c0_i32_0 = arith.constant 0 : i32
    %5 = vector.broadcast %c0_i32_0 : i32 to vector<1x256xi32>
    %6 = arith.cmpi ne, %4, %5 : vector<1x256xi32>
    %c0_i32_1 = arith.constant 0 : i32
    %7 = vector.broadcast %c0_i32_1 : i32 to vector<1x256xi32>
    %8 = arith.cmpi slt, %4, %7 : vector<1x256xi32>
    %c0_i32_2 = arith.constant 0 : i32
    %9 = arith.cmpi slt, %2, %c0_i32_2 : i32
    %10 = vector.broadcast %9 : i1 to vector<1x256xi1>
    %11 = vector.broadcast %10 : vector<1x256xi1> to vector<1x256xi1>
    %12 = arith.xori %8, %11 : vector<1x256xi1>
    %13 = arith.andi %12, %6 : vector<1x256xi1>
    %14 = vector.broadcast %2 : i32 to vector<1x256xi32>
    %15 = arith.addi %4, %14 : vector<1x256xi32>
    %16 = arith.select %13, %15, %4 : vector<1x256xi1>, vector<1x256xi32>
    %c1_i32_3 = arith.constant 1 : i32
    %17 = vector.broadcast %c1_i32_3 : i32 to vector<1x256xi32>
    %18 = arith.cmpi sge, %16, %17 : vector<1x256xi32>
    %c14_i32 = arith.constant 14 : i32
    %19 = vector.broadcast %c14_i32 : i32 to vector<1x256xi32>
    %20 = arith.cmpi sle, %16, %19 : vector<1x256xi32>
    %c0 = arith.constant 0 : index
    %c0_4 = arith.constant 0 : index
    %c0_5 = arith.constant 0 : index
    %21 = vector.load %arg1[%c0, %c0_4, %c0_5] : memref<1x64x256xbf16, #tpu.memory_space<vmem>>, vector<1x64x256xbf16>
    %22 = vector.shape_cast %21 : vector<1x64x256xbf16> to vector<64x256xbf16>
    %c0_6 = arith.constant 0 : index
    %c0_7 = arith.constant 0 : index
    %23 = vector.load %arg2[%c0_6, %c0_7] : memref<64x576xbf16, #tpu.memory_space<vmem>>, vector<64x576xbf16>
    %c0_8 = arith.constant 0 : index
    %c0_9 = arith.constant 0 : index
    %24 = vector.load %arg5[%c0_8, %c0_9] : memref<64x1xf32, #tpu.memory_space<vmem>>, vector<64x1xf32>
    %cst = arith.constant 0.000000e+00 : bf16
    %25 = vector.broadcast %cst : bf16 to vector<64x256xbf16>
    %cst_10 = arith.constant 0.000000e+00 : bf16
    %26 = vector.broadcast %cst_10 : bf16 to vector<64x1xbf16>
    %27 = vector.extract_strided_slice %22 {offsets = [0, 0], sizes = [64, 255], strides = [1, 1]} : vector<64x256xbf16> to vector<64x255xbf16>
    %28 = tpu.concatenate %26, %27 in 1 : vector<64x1xbf16>, vector<64x255xbf16> -> vector<64x256xbf16>
    %29 = vector.shape_cast %18 : vector<1x256xi1> to vector<1x256xi1>
    %30 = vector.broadcast %29 : vector<1x256xi1> to vector<64x256xi1>
    %31 = arith.select %30, %28, %25 : vector<64x256xi1>, vector<64x256xbf16>
    %32 = vector.extract_strided_slice %22 {offsets = [0, 1], sizes = [64, 255], strides = [1, 1]} : vector<64x256xbf16> to vector<64x255xbf16>
    %cst_11 = arith.constant 0.000000e+00 : bf16
    %33 = vector.broadcast %cst_11 : bf16 to vector<64x1xbf16>
    %34 = tpu.concatenate %32, %33 in 1 : vector<64x255xbf16>, vector<64x1xbf16> -> vector<64x256xbf16>
    %35 = vector.shape_cast %20 : vector<1x256xi1> to vector<1x256xi1>
    %36 = vector.broadcast %35 : vector<1x256xi1> to vector<64x256xi1>
    %37 = arith.select %36, %34, %25 : vector<64x256xi1>, vector<64x256xbf16>
    %cst_12 = arith.constant 0.000000e+00 : bf16
    %38 = vector.broadcast %cst_12 : bf16 to vector<64x16xbf16>
    %39 = vector.extract_strided_slice %31 {offsets = [0, 0], sizes = [64, 240], strides = [1, 1]} : vector<64x256xbf16> to vector<64x240xbf16>
    %40 = tpu.concatenate %38, %39 in 1 : vector<64x16xbf16>, vector<64x240xbf16> -> vector<64x256xbf16>
    %cst_13 = arith.constant 0.000000e+00 : bf16
    %41 = vector.broadcast %cst_13 : bf16 to vector<64x16xbf16>
    %42 = vector.extract_strided_slice %22 {offsets = [0, 0], sizes = [64, 240], strides = [1, 1]} : vector<64x256xbf16> to vector<64x240xbf16>
    %43 = tpu.concatenate %41, %42 in 1 : vector<64x16xbf16>, vector<64x240xbf16> -> vector<64x256xbf16>
    %cst_14 = arith.constant 0.000000e+00 : bf16
    %44 = vector.broadcast %cst_14 : bf16 to vector<64x16xbf16>
    %45 = vector.extract_strided_slice %37 {offsets = [0, 0], sizes = [64, 240], strides = [1, 1]} : vector<64x256xbf16> to vector<64x240xbf16>
    %46 = tpu.concatenate %44, %45 in 1 : vector<64x16xbf16>, vector<64x240xbf16> -> vector<64x256xbf16>
    %47 = vector.extract_strided_slice %31 {offsets = [0, 16], sizes = [64, 240], strides = [1, 1]} : vector<64x256xbf16> to vector<64x240xbf16>
    %cst_15 = arith.constant 0.000000e+00 : bf16
    %48 = vector.broadcast %cst_15 : bf16 to vector<64x16xbf16>
    %49 = tpu.concatenate %47, %48 in 1 : vector<64x240xbf16>, vector<64x16xbf16> -> vector<64x256xbf16>
    %50 = vector.extract_strided_slice %22 {offsets = [0, 16], sizes = [64, 240], strides = [1, 1]} : vector<64x256xbf16> to vector<64x240xbf16>
    %cst_16 = arith.constant 0.000000e+00 : bf16
    %51 = vector.broadcast %cst_16 : bf16 to vector<64x16xbf16>
    %52 = tpu.concatenate %50, %51 in 1 : vector<64x240xbf16>, vector<64x16xbf16> -> vector<64x256xbf16>
    %53 = vector.extract_strided_slice %37 {offsets = [0, 16], sizes = [64, 240], strides = [1, 1]} : vector<64x256xbf16> to vector<64x240xbf16>
    %cst_17 = arith.constant 0.000000e+00 : bf16
    %54 = vector.broadcast %cst_17 : bf16 to vector<64x16xbf16>
    %55 = tpu.concatenate %53, %54 in 1 : vector<64x240xbf16>, vector<64x16xbf16> -> vector<64x256xbf16>
    %56 = tpu.concatenate %40, %43, %46, %31, %22, %37, %49, %52, %55 in 0 : vector<64x256xbf16>, vector<64x256xbf16>, vector<64x256xbf16>, vector<64x256xbf16>, vector<64x256xbf16>, vector<64x256xbf16>, vector<64x256xbf16>, vector<64x256xbf16>, vector<64x256xbf16> -> vector<576x256xbf16>
    %cst_18 = arith.constant dense<0.000000e+00> : vector<64x256xf32>
    %57 = tpu.matmul %23, %56, %cst_18 {dimension_numbers = #tpu.dot_dimension_numbers<[1], [0], [0], [1], [0, 0, 1, 1], [], []>} : vector<64x576xbf16>, vector<576x256xbf16>, vector<64x256xf32> -> vector<64x256xf32>
    %58 = vector.broadcast %24 : vector<64x1xf32> to vector<64x256xf32>
    %59 = arith.addf %57, %58 : vector<64x256xf32>
    %cst_19 = arith.constant 2.000000e-01 : f32
    %60 = vector.broadcast %cst_19 : f32 to vector<64x256xf32>
    %61 = arith.mulf %60, %59 : vector<64x256xf32>
    %62 = arith.maximumf %59, %61 : vector<64x256xf32>
    %63 = arith.truncf %62 : vector<64x256xf32> to vector<64x256xbf16>
    %c0_20 = arith.constant 0 : index
    %c0_21 = arith.constant 0 : index
    %64 = vector.load %arg3[%c0_20, %c0_21] : memref<32x576xbf16, #tpu.memory_space<vmem>>, vector<32x576xbf16>
    %c0_22 = arith.constant 0 : index
    %c0_23 = arith.constant 0 : index
    %65 = vector.load %arg6[%c0_22, %c0_23] : memref<32x1xf32, #tpu.memory_space<vmem>>, vector<32x1xf32>
    %cst_24 = arith.constant 0.000000e+00 : bf16
    %66 = vector.broadcast %cst_24 : bf16 to vector<64x256xbf16>
    %cst_25 = arith.constant 0.000000e+00 : bf16
    %67 = vector.broadcast %cst_25 : bf16 to vector<64x1xbf16>
    %68 = vector.extract_strided_slice %63 {offsets = [0, 0], sizes = [64, 255], strides = [1, 1]} : vector<64x256xbf16> to vector<64x255xbf16>
    %69 = tpu.concatenate %67, %68 in 1 : vector<64x1xbf16>, vector<64x255xbf16> -> vector<64x256xbf16>
    %70 = vector.shape_cast %18 : vector<1x256xi1> to vector<1x256xi1>
    %71 = vector.broadcast %70 : vector<1x256xi1> to vector<64x256xi1>
    %72 = arith.select %71, %69, %66 : vector<64x256xi1>, vector<64x256xbf16>
    %73 = vector.extract_strided_slice %63 {offsets = [0, 1], sizes = [64, 255], strides = [1, 1]} : vector<64x256xbf16> to vector<64x255xbf16>
    %cst_26 = arith.constant 0.000000e+00 : bf16
    %74 = vector.broadcast %cst_26 : bf16 to vector<64x1xbf16>
    %75 = tpu.concatenate %73, %74 in 1 : vector<64x255xbf16>, vector<64x1xbf16> -> vector<64x256xbf16>
    %76 = vector.shape_cast %20 : vector<1x256xi1> to vector<1x256xi1>
    %77 = vector.broadcast %76 : vector<1x256xi1> to vector<64x256xi1>
    %78 = arith.select %77, %75, %66 : vector<64x256xi1>, vector<64x256xbf16>
    %cst_27 = arith.constant 0.000000e+00 : bf16
    %79 = vector.broadcast %cst_27 : bf16 to vector<64x16xbf16>
    %80 = vector.extract_strided_slice %72 {offsets = [0, 0], sizes = [64, 240], strides = [1, 1]} : vector<64x256xbf16> to vector<64x240xbf16>
    %81 = tpu.concatenate %79, %80 in 1 : vector<64x16xbf16>, vector<64x240xbf16> -> vector<64x256xbf16>
    %cst_28 = arith.constant 0.000000e+00 : bf16
    %82 = vector.broadcast %cst_28 : bf16 to vector<64x16xbf16>
    %83 = vector.extract_strided_slice %63 {offsets = [0, 0], sizes = [64, 240], strides = [1, 1]} : vector<64x256xbf16> to vector<64x240xbf16>
    %84 = tpu.concatenate %82, %83 in 1 : vector<64x16xbf16>, vector<64x240xbf16> -> vector<64x256xbf16>
    %cst_29 = arith.constant 0.000000e+00 : bf16
    %85 = vector.broadcast %cst_29 : bf16 to vector<64x16xbf16>
    %86 = vector.extract_strided_slice %78 {offsets = [0, 0], sizes = [64, 240], strides = [1, 1]} : vector<64x256xbf16> to vector<64x240xbf16>
    %87 = tpu.concatenate %85, %86 in 1 : vector<64x16xbf16>, vector<64x240xbf16> -> vector<64x256xbf16>
    %88 = vector.extract_strided_slice %72 {offsets = [0, 16], sizes = [64, 240], strides = [1, 1]} : vector<64x256xbf16> to vector<64x240xbf16>
    %cst_30 = arith.constant 0.000000e+00 : bf16
    %89 = vector.broadcast %cst_30 : bf16 to vector<64x16xbf16>
    %90 = tpu.concatenate %88, %89 in 1 : vector<64x240xbf16>, vector<64x16xbf16> -> vector<64x256xbf16>
    %91 = vector.extract_strided_slice %63 {offsets = [0, 16], sizes = [64, 240], strides = [1, 1]} : vector<64x256xbf16> to vector<64x240xbf16>
    %cst_31 = arith.constant 0.000000e+00 : bf16
    %92 = vector.broadcast %cst_31 : bf16 to vector<64x16xbf16>
    %93 = tpu.concatenate %91, %92 in 1 : vector<64x240xbf16>, vector<64x16xbf16> -> vector<64x256xbf16>
    %94 = vector.extract_strided_slice %78 {offsets = [0, 16], sizes = [64, 240], strides = [1, 1]} : vector<64x256xbf16> to vector<64x240xbf16>
    %cst_32 = arith.constant 0.000000e+00 : bf16
    %95 = vector.broadcast %cst_32 : bf16 to vector<64x16xbf16>
    %96 = tpu.concatenate %94, %95 in 1 : vector<64x240xbf16>, vector<64x16xbf16> -> vector<64x256xbf16>
    %97 = tpu.concatenate %81, %84, %87, %72, %63, %78, %90, %93, %96 in 0 : vector<64x256xbf16>, vector<64x256xbf16>, vector<64x256xbf16>, vector<64x256xbf16>, vector<64x256xbf16>, vector<64x256xbf16>, vector<64x256xbf16>, vector<64x256xbf16>, vector<64x256xbf16> -> vector<576x256xbf16>
    %cst_33 = arith.constant dense<0.000000e+00> : vector<32x256xf32>
    %98 = tpu.matmul %64, %97, %cst_33 {dimension_numbers = #tpu.dot_dimension_numbers<[1], [0], [0], [1], [0, 0, 1, 1], [], []>} : vector<32x576xbf16>, vector<576x256xbf16>, vector<32x256xf32> -> vector<32x256xf32>
    %99 = vector.broadcast %65 : vector<32x1xf32> to vector<32x256xf32>
    %100 = arith.addf %98, %99 : vector<32x256xf32>
    %cst_34 = arith.constant 2.000000e-01 : f32
    %101 = vector.broadcast %cst_34 : f32 to vector<32x256xf32>
    %102 = arith.mulf %101, %100 : vector<32x256xf32>
    %103 = arith.maximumf %100, %102 : vector<32x256xf32>
    %104 = arith.truncf %103 : vector<32x256xf32> to vector<32x256xbf16>
    %c0_35 = arith.constant 0 : index
    %c0_36 = arith.constant 0 : index
    %105 = vector.load %arg4[%c0_35, %c0_36] : memref<8x288xbf16, #tpu.memory_space<vmem>>, vector<8x288xbf16>
    %c0_37 = arith.constant 0 : index
    %c0_38 = arith.constant 0 : index
    %106 = vector.load %arg7[%c0_37, %c0_38] : memref<8x1xf32, #tpu.memory_space<vmem>>, vector<8x1xf32>
    %cst_39 = arith.constant 0.000000e+00 : bf16
    %107 = vector.broadcast %cst_39 : bf16 to vector<32x256xbf16>
    %cst_40 = arith.constant 0.000000e+00 : bf16
    %108 = vector.broadcast %cst_40 : bf16 to vector<32x1xbf16>
    %109 = vector.extract_strided_slice %104 {offsets = [0, 0], sizes = [32, 255], strides = [1, 1]} : vector<32x256xbf16> to vector<32x255xbf16>
    %110 = tpu.concatenate %108, %109 in 1 : vector<32x1xbf16>, vector<32x255xbf16> -> vector<32x256xbf16>
    %111 = vector.shape_cast %18 : vector<1x256xi1> to vector<1x256xi1>
    %112 = vector.broadcast %111 : vector<1x256xi1> to vector<32x256xi1>
    %113 = arith.select %112, %110, %107 : vector<32x256xi1>, vector<32x256xbf16>
    %114 = vector.extract_strided_slice %104 {offsets = [0, 1], sizes = [32, 255], strides = [1, 1]} : vector<32x256xbf16> to vector<32x255xbf16>
    %cst_41 = arith.constant 0.000000e+00 : bf16
    %115 = vector.broadcast %cst_41 : bf16 to vector<32x1xbf16>
    %116 = tpu.concatenate %114, %115 in 1 : vector<32x255xbf16>, vector<32x1xbf16> -> vector<32x256xbf16>
    %117 = vector.shape_cast %20 : vector<1x256xi1> to vector<1x256xi1>
    %118 = vector.broadcast %117 : vector<1x256xi1> to vector<32x256xi1>
    %119 = arith.select %118, %116, %107 : vector<32x256xi1>, vector<32x256xbf16>
    %cst_42 = arith.constant 0.000000e+00 : bf16
    %120 = vector.broadcast %cst_42 : bf16 to vector<32x16xbf16>
    %121 = vector.extract_strided_slice %113 {offsets = [0, 0], sizes = [32, 240], strides = [1, 1]} : vector<32x256xbf16> to vector<32x240xbf16>
    %122 = tpu.concatenate %120, %121 in 1 : vector<32x16xbf16>, vector<32x240xbf16> -> vector<32x256xbf16>
    %cst_43 = arith.constant 0.000000e+00 : bf16
    %123 = vector.broadcast %cst_43 : bf16 to vector<32x16xbf16>
    %124 = vector.extract_strided_slice %104 {offsets = [0, 0], sizes = [32, 240], strides = [1, 1]} : vector<32x256xbf16> to vector<32x240xbf16>
    %125 = tpu.concatenate %123, %124 in 1 : vector<32x16xbf16>, vector<32x240xbf16> -> vector<32x256xbf16>
    %cst_44 = arith.constant 0.000000e+00 : bf16
    %126 = vector.broadcast %cst_44 : bf16 to vector<32x16xbf16>
    %127 = vector.extract_strided_slice %119 {offsets = [0, 0], sizes = [32, 240], strides = [1, 1]} : vector<32x256xbf16> to vector<32x240xbf16>
    %128 = tpu.concatenate %126, %127 in 1 : vector<32x16xbf16>, vector<32x240xbf16> -> vector<32x256xbf16>
    %129 = vector.extract_strided_slice %113 {offsets = [0, 16], sizes = [32, 240], strides = [1, 1]} : vector<32x256xbf16> to vector<32x240xbf16>
    %cst_45 = arith.constant 0.000000e+00 : bf16
    %130 = vector.broadcast %cst_45 : bf16 to vector<32x16xbf16>
    %131 = tpu.concatenate %129, %130 in 1 : vector<32x240xbf16>, vector<32x16xbf16> -> vector<32x256xbf16>
    %132 = vector.extract_strided_slice %104 {offsets = [0, 16], sizes = [32, 240], strides = [1, 1]} : vector<32x256xbf16> to vector<32x240xbf16>
    %cst_46 = arith.constant 0.000000e+00 : bf16
    %133 = vector.broadcast %cst_46 : bf16 to vector<32x16xbf16>
    %134 = tpu.concatenate %132, %133 in 1 : vector<32x240xbf16>, vector<32x16xbf16> -> vector<32x256xbf16>
    %135 = vector.extract_strided_slice %119 {offsets = [0, 16], sizes = [32, 240], strides = [1, 1]} : vector<32x256xbf16> to vector<32x240xbf16>
    %cst_47 = arith.constant 0.000000e+00 : bf16
    %136 = vector.broadcast %cst_47 : bf16 to vector<32x16xbf16>
    %137 = tpu.concatenate %135, %136 in 1 : vector<32x240xbf16>, vector<32x16xbf16> -> vector<32x256xbf16>
    %138 = tpu.concatenate %122, %125, %128, %113, %104, %119, %131, %134, %137 in 0 : vector<32x256xbf16>, vector<32x256xbf16>, vector<32x256xbf16>, vector<32x256xbf16>, vector<32x256xbf16>, vector<32x256xbf16>, vector<32x256xbf16>, vector<32x256xbf16>, vector<32x256xbf16> -> vector<288x256xbf16>
    %cst_48 = arith.constant dense<0.000000e+00> : vector<8x256xf32>
    %139 = tpu.matmul %105, %138, %cst_48 {dimension_numbers = #tpu.dot_dimension_numbers<[1], [0], [0], [1], [0, 0, 1, 1], [], []>} : vector<8x288xbf16>, vector<288x256xbf16>, vector<8x256xf32> -> vector<8x256xf32>
    %140 = vector.broadcast %106 : vector<8x1xf32> to vector<8x256xf32>
    %141 = arith.addf %139, %140 : vector<8x256xf32>
    %142 = vector.extract_strided_slice %141 {offsets = [0, 0], sizes = [1, 256], strides = [1, 1]} : vector<8x256xf32> to vector<1x256xf32>
    %143 = vector.shape_cast %142 : vector<1x256xf32> to vector<1x1x256xf32>
    %c0_49 = arith.constant 0 : index
    %c0_50 = arith.constant 0 : index
    %c0_51 = arith.constant 0 : index
    %144 = vector.load %arg8[%c0_49, %c0_50, %c0_51] : memref<1x1x256xf32, #tpu.memory_space<vmem>>, vector<1x1x256xf32>
    tpu.vector_store %arg8[%c0_49, %c0_50, %c0_51], %143 {strides = array<i32>} : memref<1x1x256xf32, #tpu.memory_space<vmem>>, vector<1x1x256xf32>,
    return
  }
  func.func @transform_0(%arg0: i32) -> (i32, i32, i32) {
    %c0_i32 = arith.constant 0 : i32
    %c0_i32_0 = arith.constant 0 : i32
    %c0_i32_1 = arith.constant 0 : i32
    return %arg0, %c0_i32, %c0_i32_0 : i32, i32, i32
  }
  func.func @transform_1(%arg0: i32) -> (i32, i32) {
    %c0_i32 = arith.constant 0 : i32
    %c0_i32_0 = arith.constant 0 : i32
    %c0_i32_1 = arith.constant 0 : i32
    return %c0_i32, %c0_i32_0 : i32, i32
  }
  func.func @transform_2(%arg0: i32) -> (i32, i32) {
    %c0_i32 = arith.constant 0 : i32
    %c0_i32_0 = arith.constant 0 : i32
    %c0_i32_1 = arith.constant 0 : i32
    return %c0_i32, %c0_i32_0 : i32, i32
  }
  func.func @transform_3(%arg0: i32) -> (i32, i32) {
    %c0_i32 = arith.constant 0 : i32
    %c0_i32_0 = arith.constant 0 : i32
    %c0_i32_1 = arith.constant 0 : i32
    return %c0_i32, %c0_i32_0 : i32, i32
  }
  func.func @transform_4(%arg0: i32) -> (i32, i32) {
    %c0_i32 = arith.constant 0 : i32
    %c0_i32_0 = arith.constant 0 : i32
    %c0_i32_1 = arith.constant 0 : i32
    return %c0_i32, %c0_i32_0 : i32, i32
  }
  func.func @transform_5(%arg0: i32) -> (i32, i32) {
    %c0_i32 = arith.constant 0 : i32
    %c0_i32_0 = arith.constant 0 : i32
    %c0_i32_1 = arith.constant 0 : i32
    return %c0_i32, %c0_i32_0 : i32, i32
  }
  func.func @transform_6(%arg0: i32) -> (i32, i32) {
    %c0_i32 = arith.constant 0 : i32
    %c0_i32_0 = arith.constant 0 : i32
    %c0_i32_1 = arith.constant 0 : i32
    return %c0_i32, %c0_i32_0 : i32, i32
  }
  func.func @transform_7(%arg0: i32) -> (i32, i32, i32) {
    %c0_i32 = arith.constant 0 : i32
    %c0_i32_0 = arith.constant 0 : i32
    %c0_i32_1 = arith.constant 0 : i32
    return %arg0, %c0_i32, %c0_i32_0 : i32, i32, i32
  }
}

</mosaic_0001>

<llo_original>
// kernel: tpu_custom_call.1
$region0: #{tpu_custom_call.1}
  #allocation0 [shape = 'u32[]', space=smem, size = 0x4, offset = 0x4, fixed_abs, tag = 'smem constant byte address 0x4 - core index']
  #allocation1 [shape = 'u32[144,128]{1,0:T(1,128)}', space=vmem, size = 0x12000, scoped, tag = 'internal scratch']
  %s0 = inlined_call_operand.hbm [shape: bf16[2,64,256], index: 0, kind: input, shape index: {}]
  %s1 = inlined_call_operand.hbm [shape: bf16[64,576], index: 1, kind: input, shape index: {}]
  %s2 = inlined_call_operand.vmem [shape: bf16[32,576], index: 2, kind: input, shape index: {}]
  %s3 = inlined_call_operand.vmem [shape: bf16[8,288], index: 3, kind: input, shape index: {}]
  %s4 = inlined_call_operand.vmem [shape: f32[64,1], index: 4, kind: input, shape index: {}]
  %s5 = inlined_call_operand.vmem [shape: f32[32,1], index: 5, kind: input, shape index: {}]
  %s6 = inlined_call_operand.vmem [shape: f32[8,1], index: 6, kind: input, shape index: {}]
  %s7 = inlined_call_operand.hbm [shape: f32[2,1,256], index: 7, kind: output, shape index: {}]
  %s8 = sld [smem:[#allocation0]]
  $region69: #{tpu_custom_call.1} parent=0
    _
  %s10 = ssub.s32 1, %s8
  %s11 = scalar_select 0, %s10, %s8
  $region1: #{tpu_custom_call.1} parent=0
    #allocation2 [shape = 'u8[65536]{0}', space=vmem, size = 0x10000, scoped, tag = 'input window, operand 0']
    #allocation3 [shape = 's32[2]{0}', space=sflag, size = 0x8, scoped, tag = 'scoped memory for tpu_custom_call.1']
    #allocation4 [shape = 's32[2]{0}', space=sflag, size = 0x8, scoped, tag = 'scoped memory for tpu_custom_call.1']
    #allocation5 [shape = 'u8[81920]{0}', space=vmem, size = 0x14000, scoped, tag = 'input window, operand 1, single buffered']
    #allocation6 [shape = 's32[1]{0}', space=sflag, size = 0x4, scoped, tag = 'scoped memory for tpu_custom_call.1']
    #allocation7 [shape = 'u8[2048]{0}', space=vmem, size = 0x800, scoped, tag = 'output window, operand 0']
    %12 = vsyncpa [#allocation3], 0
    %s13 = scalar_lea.sflag [#allocation3], 1
    %14 = vsyncpa %s13, 0
    %15 = vsyncpa [#allocation6], 0
    %16 = vsyncpa [#allocation4], 0
    %s17 = scalar_lea.sflag [#allocation4], 1
    %18 = vsyncpa %s17, 0
    loop: start=0, step=1, limit=4
    $region2: #{tpu_custom_call.1} parent=1 // loop_pre_header
      _
    $region3: #{tpu_custom_call.1} parent=1 // loop_header
      %s20 = sphi 0, %s24
      %p21 = scmp.ge.s32.totalorder %s20, 4
      %s30 = sphi 0, %s32
      %s33 = sphi 0, %s30
      %s34 = sphi 0, %s33
      %s50 = sphi 0, %s34
      %s54 = sphi 0, %s54
      %s56 = sphi 0, %s54
      %s57 = sphi 0, %s56
      %s71 = sphi 0, %s57
      %s75 = sphi 0, %s75
      %s77 = sphi 0, %s75
      %s78 = sphi 0, %s77
      %s92 = sphi 0, %s78
      %s96 = sphi 0, %s96
      %s98 = sphi 0, %s96
      %s99 = sphi 0, %s98
      %s113 = sphi 0, %s99
      %s117 = sphi 0, %s117
      %s119 = sphi 0, %s117
      %s120 = sphi 0, %s119
      %s134 = sphi 0, %s120
      %s138 = sphi 0, %s138
      %s140 = sphi 0, %s138
      %s141 = sphi 0, %s140
      %s155 = sphi 0, %s141
      %s159 = sphi 0, %s159
      %s161 = sphi 0, %s159
      %s162 = sphi 0, %s161
      %s176 = sphi 0, %s162
      %s182 = sphi 0, %s184
      %s185 = sphi 0, %s182
      %s186 = sphi 0, %s185
      %s202 = sphi 0, %s186
    $region4: #{tpu_custom_call.1} parent=1 // loop_header_branch
      %23 = sbr.rel (%p21) target = $region8
    $region5: #{tpu_custom_call.1} parent=1 // loop_body
      %s25 = ssub.s32 %s20, 1
      %s26 = ssub.s32 %s20, 2
      %s27 = sadd.s32 %s20, 1
      %s28 = ssub.s32 %s20, %s27
      %p29 = scmp.eq.s32.totalorder %s28, 0
      %s31 = sadd.s32 %s30, 1
      %s32 = scalar_select %p29, %s30, %s31
      %p35 = pneg %p29
      %p36 = scmp.eq.s32.totalorder %s20, 1
      %p37 = por %p35, %p36
      %p38 = scmp.ne.s32.totalorder %s30, %s33
      %p39 = scmp.eq.s32.totalorder %s20, 0
      %p40 = por %p38, %p39
      %p41 = scmp.ne.s32.totalorder %s30, %s33
      %p42 = scmp.eq.s32.totalorder %s25, 1
      %p43 = por %p41, %p42
      %p44 = scmp.ne.s32.totalorder %s33, %s34
      %p45 = scmp.eq.s32.totalorder %s25, 0
      %p46 = por %p44, %p45
      %p47 = scmp.ne.s32.totalorder %s33, %s34
      %p48 = scmp.eq.s32.totalorder %s26, 1
      %p49 = por %p47, %p48
      %p51 = scmp.ne.s32.totalorder %s34, %s50
      %p52 = scmp.eq.s32.totalorder %s26, 0
      %p53 = por %p51, %p52
      %s55 = sadd.s32 %s54, 1
      %p58 = scmp.eq.s32.totalorder %s20, 1
      %p59 = scmp.ne.s32.totalorder %s54, %s56
      %p60 = scmp.eq.s32.totalorder %s20, 0
      %p61 = por %p59, %p60
      %p62 = scmp.ne.s32.totalorder %s54, %s56
      %p63 = scmp.eq.s32.totalorder %s25, 1
      %p64 = por %p62, %p63
      %p65 = scmp.ne.s32.totalorder %s56, %s57
      %p66 = scmp.eq.s32.totalorder %s25, 0
      %p67 = por %p65, %p66
      %p68 = scmp.ne.s32.totalorder %s56, %s57
      %p69 = scmp.eq.s32.totalorder %s26, 1
      %p70 = por %p68, %p69
      %p72 = scmp.ne.s32.totalorder %s57, %s71
      %p73 = scmp.eq.s32.totalorder %s26, 0
      %p74 = por %p72, %p73
      %s76 = sadd.s32 %s75, 1
      %p79 = scmp.eq.s32.totalorder %s20, 1
      %p80 = scmp.ne.s32.totalorder %s75, %s77
      %p81 = scmp.eq.s32.totalorder %s20, 0
      %p82 = por %p80, %p81
      %p83 = scmp.ne.s32.totalorder %s75, %s77
      %p84 = scmp.eq.s32.totalorder %s25, 1
      %p85 = por %p83, %p84
      %p86 = scmp.ne.s32.totalorder %s77, %s78
      %p87 = scmp.eq.s32.totalorder %s25, 0
      %p88 = por %p86, %p87
      %p89 = scmp.ne.s32.totalorder %s77, %s78
      %p90 = scmp.eq.s32.totalorder %s26, 1
      %p91 = por %p89, %p90
      %p93 = scmp.ne.s32.totalorder %s78, %s92
      %p94 = scmp.eq.s32.totalorder %s26, 0
      %p95 = por %p93, %p94
      %s97 = sadd.s32 %s96, 1
      %p100 = scmp.eq.s32.totalorder %s20, 1
      %p101 = scmp.ne.s32.totalorder %s96, %s98
      %p102 = scmp.eq.s32.totalorder %s20, 0
      %p103 = por %p101, %p102
      %p104 = scmp.ne.s32.totalorder %s96, %s98
      %p105 = scmp.eq.s32.totalorder %s25, 1
      %p106 = por %p104, %p105
      %p107 = scmp.ne.s32.totalorder %s98, %s99
      %p108 = scmp.eq.s32.totalorder %s25, 0
      %p109 = por %p107, %p108
      %p110 = scmp.ne.s32.totalorder %s98, %s99
      %p111 = scmp.eq.s32.totalorder %s26, 1
      %p112 = por %p110, %p111
      %p114 = scmp.ne.s32.totalorder %s99, %s113
      %p115 = scmp.eq.s32.totalorder %s26, 0
      %p116 = por %p114, %p115
      %s118 = sadd.s32 %s117, 1
      %p121 = scmp.eq.s32.totalorder %s20, 1
      %p122 = scmp.ne.s32.totalorder %s117, %s119
      %p123 = scmp.eq.s32.totalorder %s20, 0
      %p124 = por %p122, %p123
      %p125 = scmp.ne.s32.totalorder %s117, %s119
      %p126 = scmp.eq.s32.totalorder %s25, 1
      %p127 = por %p125, %p126
      %p128 = scmp.ne.s32.totalorder %s119, %s120
      %p129 = scmp.eq.s32.totalorder %s25, 0
      %p130 = por %p128, %p129
      %p131 = scmp.ne.s32.totalorder %s119, %s120
      %p132 = scmp.eq.s32.totalorder %s26, 1
      %p133 = por %p131, %p132
      %p135 = scmp.ne.s32.totalorder %s120, %s134
      %p136 = scmp.eq.s32.totalorder %s26, 0
      %p137 = por %p135, %p136
      %s139 = sadd.s32 %s138, 1
      %p142 = scmp.eq.s32.totalorder %s20, 1
      %p143 = scmp.ne.s32.totalorder %s138, %s140
      %p144 = scmp.eq.s32.totalorder %s20, 0
      %p145 = por %p143, %p144
      %p146 = scmp.ne.s32.totalorder %s138, %s140
      %p147 = scmp.eq.s32.totalorder %s25, 1
      %p148 = por %p146, %p147
      %p149 = scmp.ne.s32.totalorder %s140, %s141
      %p150 = scmp.eq.s32.totalorder %s25, 0
      %p151 = por %p149, %p150
      %p152 = scmp.ne.s32.totalorder %s140, %s141
      %p153 = scmp.eq.s32.totalorder %s26, 1
      %p154 = por %p152, %p153
      %p156 = scmp.ne.s32.totalorder %s141, %s155
      %p157 = scmp.eq.s32.totalorder %s26, 0
      %p158 = por %p156, %p157
      %s160 = sadd.s32 %s159, 1
      %p163 = scmp.eq.s32.totalorder %s20, 1
      %p164 = scmp.ne.s32.totalorder %s159, %s161
      %p165 = scmp.eq.s32.totalorder %s20, 0
      %p166 = por %p164, %p165
      %p167 = scmp.ne.s32.totalorder %s159, %s161
      %p168 = scmp.eq.s32.totalorder %s25, 1
      %p169 = por %p167, %p168
      %p170 = scmp.ne.s32.totalorder %s161, %s162
      %p171 = scmp.eq.s32.totalorder %s25, 0
      %p172 = por %p170, %p171
      %p173 = scmp.ne.s32.totalorder %s161, %s162
      %p174 = scmp.eq.s32.totalorder %s26, 1
      %p175 = por %p173, %p174
      %p177 = scmp.ne.s32.totalorder %s162, %s176
      %p178 = scmp.eq.s32.totalorder %s26, 0
      %p179 = por %p177, %p178
      %s180 = ssub.s32 %s20, %s27
      %p181 = scmp.eq.s32.totalorder %s180, 0
      %s183 = sadd.s32 %s182, 1
      %s184 = scalar_select %p181, %s182, %s183
      %p187 = pneg %p181
      %p188 = scmp.eq.s32.totalorder %s20, 1
      %p189 = por %p187, %p188
      %p190 = scmp.ne.s32.totalorder %s182, %s185
      %p191 = scmp.eq.s32.totalorder %s20, 0
      %p192 = por %p190, %p191
      %p193 = scmp.ne.s32.totalorder %s182, %s185
      %p194 = scmp.eq.s32.totalorder %s25, 1
      %p195 = por %p193, %p194
      %p196 = scmp.ne.s32.totalorder %s185, %s186
      %p197 = scmp.eq.s32.totalorder %s25, 0
      %p198 = por %p196, %p197
      %p199 = scmp.ne.s32.totalorder %s185, %s186
      %p200 = scmp.eq.s32.totalorder %s26, 1
      %p201 = por %p199, %p200
      %p203 = scmp.ne.s32.totalorder %s186, %s202
      %p204 = scmp.eq.s32.totalorder %s26, 0
      %p205 = por %p203, %p204
      %p206 = scmp.le.s32.totalorder 1, %s20
      %p207 = scmp.lt.s32.totalorder %s20, 3
      %p208 = pnand %p206, %p207
      %p209 = pneg %p208
      // Predicated region
      $region9: #{tpu_custom_call.1} parent=5 // pred_check
        _
      $region10: #{tpu_custom_call.1} parent=5 // pred_check_branch
        %211 = sbr.rel (%p208) target = $region12
      $region11: #{tpu_custom_call.1} parent=5 // pred_region
        %s212 = ssub.s32 %s20, 1
        // Predicated region
        $region13: #{tpu_custom_call.1} parent=11 // pred_check
          %p213 = pneg %p67
        $region14: #{tpu_custom_call.1} parent=11 // pred_check_branch
          %215 = sbr.rel (%p213) target = $region16
        $region15: #{tpu_custom_call.1} parent=11 // pred_region
          %s217 = ssub.s32 2560, 2560
          %218 = vsyncadd [#allocation6], %s217
          %s219 = sshll.u32 [#allocation5], 4
          %s220 = int_to_ptr.vmem [resolvable:$true] %s219
          %225 = dma.hbm_to_vmem [thread:$0]  %s1, 2560, %s220, [#allocation6], 320, 320, 20
        $region16: #{tpu_custom_call.1} parent=11 // pred_fallthru
          _
        // Predicated region
        $region17: #{tpu_custom_call.1} parent=11 // pred_check
          %p226 = pneg %p88
        $region18: #{tpu_custom_call.1} parent=11 // pred_check_branch
          %228 = sbr.rel (%p226) target = $region20
        $region19: #{tpu_custom_call.1} parent=11 // pred_region
          _
        $region20: #{tpu_custom_call.1} parent=11 // pred_fallthru
          _
        // Predicated region
        $region21: #{tpu_custom_call.1} parent=11 // pred_check
          %p229 = pneg %p109
        $region22: #{tpu_custom_call.1} parent=11 // pred_check_branch
          %231 = sbr.rel (%p229) target = $region24
        $region23: #{tpu_custom_call.1} parent=11 // pred_region
          _
        $region24: #{tpu_custom_call.1} parent=11 // pred_fallthru
          _
        // Predicated region
        $region25: #{tpu_custom_call.1} parent=11 // pred_check
          %p232 = pneg %p130
        $region26: #{tpu_custom_call.1} parent=11 // pred_check_branch
          %234 = sbr.rel (%p232) target = $region28
        $region27: #{tpu_custom_call.1} parent=11 // pred_region
          _
        $region28: #{tpu_custom_call.1} parent=11 // pred_fallthru
          _
        // Predicated region
        $region29: #{tpu_custom_call.1} parent=11 // pred_check
          %p235 = pneg %p151
        $region30: #{tpu_custom_call.1} parent=11 // pred_check_branch
          %237 = sbr.rel (%p235) target = $region32
        $region31: #{tpu_custom_call.1} parent=11 // pred_region
          _
        $region32: #{tpu_custom_call.1} parent=11 // pred_fallthru
          _
        // Predicated region
        $region33: #{tpu_custom_call.1} parent=11 // pred_check
          %p238 = pneg %p172
        $region34: #{tpu_custom_call.1} parent=11 // pred_check_branch
          %240 = sbr.rel (%p238) target = $region36
        $region35: #{tpu_custom_call.1} parent=11 // pred_region
          _
        $region36: #{tpu_custom_call.1} parent=11 // pred_fallthru
          _
      $region12: #{tpu_custom_call.1} parent=5 // pred_fallthru
        _
      %p241 = scmp.lt.s32.totalorder %s20, 2
      // Predicated region
      $region37: #{tpu_custom_call.1} parent=5 // pred_check
        %p242 = pneg %p241
      $region38: #{tpu_custom_call.1} parent=5 // pred_check_branch
        %244 = sbr.rel (%p242) target = $region40
      $region39: #{tpu_custom_call.1} parent=5 // pred_region
        // Predicated region
        $region41: #{tpu_custom_call.1} parent=39 // pred_check
          %p245 = pneg %p40
        $region42: #{tpu_custom_call.1} parent=39 // pred_check_branch
          %247 = sbr.rel (%p245) target = $region44
        $region43: #{tpu_custom_call.1} parent=39 // pred_region
          %s248 = sand.u32 %s30, 1
          %s249 = scalar_lea.sflag [#allocation3], %s248
          %s250 = sand.u32 %s30, 1
          %s251 = smul.addr %s250, 64
          %s252 = scalar_lea.vmem [#allocation2], %s251
          %s254 = ssub.s32 1024, 1024
          %255 = vsyncadd %s249, %s254
          %s256 = smul.addr %s20, 16
          %s257 = smul.addr %s256, 64
          %s258 = scalar_lea.hbm %s0, %s257
          %s259 = sshll.u32 %s252, 4
          %s260 = int_to_ptr.vmem [resolvable:$true] %s259
          %265 = dma.hbm_to_vmem [thread:$0]  %s258, 1024, %s260, %s249, 128, 128, 8
        $region44: #{tpu_custom_call.1} parent=39 // pred_fallthru
          _
      $region40: #{tpu_custom_call.1} parent=5 // pred_fallthru
        _
      %p266 = scmp.le.s32.totalorder 1, %s20
      %p267 = scmp.lt.s32.totalorder %s20, 3
      %p268 = pnand %p266, %p267
      %p269 = pneg %p268
      // Predicated region
      $region45: #{tpu_custom_call.1} parent=5 // pred_check
        _
      $region46: #{tpu_custom_call.1} parent=5 // pred_check_branch
        %271 = sbr.rel (%p268) target = $region48
      $region47: #{tpu_custom_call.1} parent=5 // pred_region
        %s272 = ssub.s32 %s20, 1
        %s273 = sand.u32 %s33, 1
        %s274 = scalar_lea.sflag [#allocation3], %s273
        %s275 = sand.u32 %s33, 1
        %s276 = smul.addr %s275, 64
        %s277 = scalar_lea.vmem [#allocation2], %s276
        // Predicated region
        $region49: #{tpu_custom_call.1} parent=47 // pred_check
          %p278 = pneg %p46
        $region50: #{tpu_custom_call.1} parent=47 // pred_check_branch
          %280 = sbr.rel (%p278) target = $region52
        $region51: #{tpu_custom_call.1} parent=47 // pred_region
          %281 = dma.done %s274, 1024
        $region52: #{tpu_custom_call.1} parent=47 // pred_fallthru
          _
        // Predicated region
        $region53: #{tpu_custom_call.1} parent=47 // pred_check
          %p282 = pneg %p67
        $region54: #{tpu_custom_call.1} parent=47 // pred_check_branch
          %284 = sbr.rel (%p282) target = $region56
        $region55: #{tpu_custom_call.1} parent=47 // pred_region
          %285 = dma.done [#allocation6], 2560
        $region56: #{tpu_custom_call.1} parent=47 // pred_fallthru
          _
        %s286 = sand.u32 %s33, 1
        %s287 = scalar_lea.sflag [#allocation3], %s286
        %s288 = sand.u32 %s33, 1
        %s289 = smul.addr %s288, 64
        %s290 = scalar_lea.vmem [#allocation2], %s289
        %p291 = pneg %p46
        %p292 = pneg %p43
        %p293 = pneg %p67
        %p294 = pneg %p64
        %p295 = pneg %p88
        %p296 = pneg %p85
        %p297 = pneg %p109
        %p298 = pneg %p106
        %p299 = pneg %p130
        %p300 = pneg %p127
        %p301 = pneg %p151
        %p302 = pneg %p148
        %p303 = pneg %p172
        %p304 = pneg %p169
        %p305 = pneg %p198
        %p306 = pneg %p195
        %s307 = sand.u32 %s185, 1
        %s308 = scalar_lea.sflag [#allocation4], %s307
        %s309 = sand.u32 %s185, 1
        %s310 = smul.addr %s309, 2
        %s311 = scalar_lea.vmem [#allocation7], %s310
        %v315 = vlaneseq
        %v316 = vand.u32 %v315, 127
        %v317 = vadd.s32 %v316, 128
        %vm318 = vcmp.lt.s32.totalorder %v316, 0
        %v319 = vsub.s32 0, %v316
        %v320 = vsel %vm318, %v319, %v316
        %v321 = vshrl.u32 %v320, 4
        %v322 = vand.u32 %v320, 15
        %v323 = vsub.s32 0, %v322
        %v324 = vsel %vm318, %v323, %v322
        %vm325 = vcmp.lt.s32.totalorder %v317, 0
        %v326 = vsub.s32 0, %v317
        %v327 = vsel %vm325, %v326, %v317
        %v328 = vshrl.u32 %v327, 4
        %v329 = vand.u32 %v327, 15
        %v330 = vsub.s32 0, %v329
        %v331 = vsel %vm325, %v330, %v329
        %vm332 = vcmp.ne.s32.totalorder %v324, 0
        %vm333 = vcmp.ne.s32.totalorder %v331, 0
        %vm334 = vcmp.lt.s32.totalorder %v324, 0
        %vm335 = vcmp.lt.s32.totalorder %v331, 0
        %vm336 = vmand %vm334, %vm332
        %vm337 = vmand %vm335, %vm333
        %v338 = vadd.s32 %v324, 16
        %v339 = vadd.s32 %v331, 16
        %v340 = vsel %vm336, %v338, %v324
        %v341 = vsel %vm337, %v339, %v331
        %vm342 = vcmp.ge.s32.totalorder %v340, 1
        %vm343 = vcmp.ge.s32.totalorder %v341, 1
        %vm344 = vcmp.le.s32.totalorder %v340, 14
        %vm345 = vcmp.le.s32.totalorder %v341, 14
        %v346 = vld [vmem:[%s277] sm:$0xff]
        %v347 = vld [vmem:[%s277 + $0x8] sm:$0xff]
        %v348 = vld [vmem:[%s277 + $0x10] sm:$0xff]
        %v349 = vld [vmem:[%s277 + $0x18] sm:$0xff]
        %v350 = vld [vmem:[%s277 + $0x20] sm:$0xff]
        %v351 = vld [vmem:[%s277 + $0x28] sm:$0xff]
        %v352 = vld [vmem:[%s277 + $0x30] sm:$0xff]
        %v353 = vld [vmem:[%s277 + $0x38] sm:$0xff]
        %v354 = vld [vmem:[#allocation5] sm:$0xff]
        %v355 = vld [vmem:[#allocation5 + $0x8] sm:$0xff]
        %v356 = vld [vmem:[#allocation5 + $0x10] sm:$0xf]
        %v357 = vld [vmem:[#allocation5 + $0x14] sm:$0xff]
        %v358 = vld [vmem:[#allocation5 + $0x1c] sm:$0xff]
        %v359 = vld [vmem:[#allocation5 + $0x24] sm:$0xf]
        %v360 = vld [vmem:[#allocation5 + $0x28] sm:$0xff]
        %v361 = vld [vmem:[#allocation5 + $0x30] sm:$0xff]
        %v362 = vld [vmem:[#allocation5 + $0x38] sm:$0xf]
        %v363 = vld [vmem:[#allocation5 + $0x3c] sm:$0xff]
        %v364 = vld [vmem:[#allocation5 + $0x44] sm:$0xff]
        %v365 = vld [vmem:[#allocation5 + $0x4c] sm:$0xf]
        %v366 = vld [vmem:[#allocation5 + $0x50] sm:$0xff]
        %v367 = vld [vmem:[#allocation5 + $0x58] sm:$0xff]
        %v368 = vld [vmem:[#allocation5 + $0x60] sm:$0xf]
        %v369 = vld [vmem:[#allocation5 + $0x64] sm:$0xff]
        %v370 = vld [vmem:[#allocation5 + $0x6c] sm:$0xff]
        %v371 = vld [vmem:[#allocation5 + $0x74] sm:$0xf]
        %v372 = vld [vmem:[#allocation5 + $0x78] sm:$0xff]
        %v373 = vld [vmem:[#allocation5 + $0x80] sm:$0xff]
        %v374 = vld [vmem:[#allocation5 + $0x88] sm:$0xf]
        %v375 = vld [vmem:[#allocation5 + $0x8c] sm:$0xff]
        %v376 = vld [vmem:[#allocation5 + $0x94] sm:$0xff]
        %v377 = vld [vmem:[#allocation5 + $0x9c] sm:$0xf]
        %v378 = vld [vmem:[%s4] sm:$0xff]
        %v379 = vld [vmem:[%s4 + $0x8] sm:$0xff]
        %v380 = vld [vmem:[%s4 + $0x10] sm:$0xff]
        %v381 = vld [vmem:[%s4 + $0x18] sm:$0xff]
        %v382 = vld [vmem:[%s4 + $0x20] sm:$0xff]
        %v383 = vld [vmem:[%s4 + $0x28] sm:$0xff]
        %v384 = vld [vmem:[%s4 + $0x30] sm:$0xff]
        %v385 = vld [vmem:[%s4 + $0x38] sm:$0xff]
        %v394 = vunpack.c.l.b16 %v346
        %v395 = vunpack.c.h.b16 %v346
        %v396 = vunpack.c.l.b16 %v347
        %v397 = vunpack.c.h.b16 %v347
        %v398 = vunpack.c.l.b16 %v348
        %v399 = vunpack.c.h.b16 %v348
        %v400 = vunpack.c.l.b16 %v349
        %v401 = vunpack.c.h.b16 %v349
        %v402 = vunpack.c.l.b16 %v350
        %v403 = vunpack.c.h.b16 %v350
        %v404 = vunpack.c.l.b16 %v351
        %v405 = vunpack.c.h.b16 %v351
        %v406 = vunpack.c.l.b16 %v352
        %v407 = vunpack.c.h.b16 %v352
        %v408 = vunpack.c.l.b16 %v353
        %v409 = vunpack.c.h.b16 %v353
        %v410 = vpack.c.b16 %v396, %v394
        %v411 = vpack.c.b16 %v397, %v395
        %v412 = vpack.c.b16 %v400, %v398
        %v413 = vpack.c.b16 %v401, %v399
        %v414 = vpack.c.b16 %v404, %v402
        %v415 = vpack.c.b16 %v405, %v403
        %v416 = vpack.c.b16 %v408, %v406
        %v417 = vpack.c.b16 %v409, %v407
        %418 = vrot.lane.b32.xlu0 %v410, 1
        %v419 = vpop.permute.xlu0 %418
        %420 = vrot.lane.b32.xlu0 %v411, 1
        %v421 = vpop.permute.xlu0 %420
        %422 = vrot.lane.b32.xlu0 %v412, 1
        %v423 = vpop.permute.xlu0 %422
        %424 = vrot.lane.b32.xlu0 %v413, 1
        %v425 = vpop.permute.xlu0 %424
        %426 = vrot.lane.b32.xlu0 %v414, 1
        %v427 = vpop.permute.xlu0 %426
        %428 = vrot.lane.b32.xlu0 %v415, 1
        %v429 = vpop.permute.xlu0 %428
        %430 = vrot.lane.b32.xlu0 %v416, 1
        %v431 = vpop.permute.xlu0 %430
        %432 = vrot.lane.b32.xlu0 %v417, 1
        %v433 = vpop.permute.xlu0 %432
        %vm434 = vcmask 7168
        %v435 = vsel %vm434, %v419, %v421
        %v436 = vsel %vm434, %v423, %v425
        %v437 = vsel %vm434, %v427, %v429
        %v438 = vsel %vm434, %v431, %v433
        %vm443 = vcmask 7168
        %v446 = vsel %vm443, 0, %v419
        %v449 = vsel %vm443, 0, %v423
        %v452 = vsel %vm443, 0, %v427
        %v455 = vsel %vm443, 0, %v431
        %v457 = vsel %vm342, 1, 0
        %v458 = vsel %vm343, 1, 0
        %vm459 = vcmp.eq.s32.totalorder %v457, 1
        %vm460 = vcmp.eq.s32.totalorder %v458, 1
        %vm461 = vmpackc.low %vm460, %vm459
        %v462 = vsel %vm461, 65537, 0
        %v463 = vlaneseq
        %v464 = vshrl.u32 %v463, 7
        %v465 = vsub.s32 0, %v464
        %v466 = vrot.slane %v462, %v465
        %v467 = vlaneseq
        %v468 = vshrl.u32 %v467, 7
        %v469 = vsub.s32 4, %v468
        %v470 = vrot.slane %v462, %v469
        %vm471 = vcmp.ne.s16.totalorder %v466, 0
        %vm472 = vcmp.ne.s16.totalorder %v470, 0
        %v473 = vsel %vm471, %v446, 0
        %v474 = vsel %vm472, %v435, 0
        %v475 = vsel %vm471, %v449, 0
        %v476 = vsel %vm472, %v436, 0
        %v477 = vsel %vm471, %v452, 0
        %v478 = vsel %vm472, %v437, 0
        %v479 = vsel %vm471, %v455, 0
        %v480 = vsel %vm472, %v438, 0
        %481 = vrot.lane.b32.xlu0 %v410, 127
        %v482 = vpop.permute.xlu0 %481
        %483 = vrot.lane.b32.xlu0 %v411, 127
        %v484 = vpop.permute.xlu0 %483
        %485 = vrot.lane.b32.xlu0 %v412, 127
        %v486 = vpop.permute.xlu0 %485
        %487 = vrot.lane.b32.xlu0 %v413, 127
        %v488 = vpop.permute.xlu0 %487
        %489 = vrot.lane.b32.xlu0 %v414, 127
        %v490 = vpop.permute.xlu0 %489
        %491 = vrot.lane.b32.xlu0 %v415, 127
        %v492 = vpop.permute.xlu0 %491
        %493 = vrot.lane.b32.xlu0 %v416, 127
        %v494 = vpop.permute.xlu0 %493
        %495 = vrot.lane.b32.xlu0 %v417, 127
        %v496 = vpop.permute.xlu0 %495
        %vm497 = vcmask 1039360
        %v498 = vsel %vm497, %v482, %v484
        %v499 = vsel %vm497, %v486, %v488
        %v500 = vsel %vm497, %v490, %v492
        %v501 = vsel %vm497, %v494, %v496
        %vm506 = vcmask 1039360
        %v508 = vsel %vm506, %v484, 0
        %v511 = vsel %vm506, %v488, 0
        %v514 = vsel %vm506, %v492, 0
        %v517 = vsel %vm506, %v496, 0
        %v519 = vsel %vm344, 1, 0
        %v520 = vsel %vm345, 1, 0
        %vm521 = vcmp.eq.s32.totalorder %v519, 1
        %vm522 = vcmp.eq.s32.totalorder %v520, 1
        %vm523 = vmpackc.low %vm522, %vm521
        %v524 = vsel %vm523, 65537, 0
        %v525 = vlaneseq
        %v526 = vshrl.u32 %v525, 7
        %v527 = vsub.s32 0, %v526
        %v528 = vrot.slane %v524, %v527
        %v529 = vlaneseq
        %v530 = vshrl.u32 %v529, 7
        %v531 = vsub.s32 4, %v530
        %v532 = vrot.slane %v524, %v531
        %vm533 = vcmp.ne.s16.totalorder %v528, 0
        %vm534 = vcmp.ne.s16.totalorder %v532, 0
        %v535 = vsel %vm533, %v498, 0
        %v536 = vsel %vm534, %v508, 0
        %v537 = vsel %vm533, %v499, 0
        %v538 = vsel %vm534, %v511, 0
        %v539 = vsel %vm533, %v500, 0
        %v540 = vsel %vm534, %v514, 0
        %v541 = vsel %vm533, %v501, 0
        %v542 = vsel %vm534, %v517, 0
        %551 = vrot.lane.b32.xlu0 %v473, 16
        %v552 = vpop.permute.xlu0 %551
        %553 = vrot.lane.b32.xlu0 %v474, 16
        %v554 = vpop.permute.xlu0 %553
        %555 = vrot.lane.b32.xlu0 %v475, 16
        %v556 = vpop.permute.xlu0 %555
        %557 = vrot.lane.b32.xlu0 %v476, 16
        %v558 = vpop.permute.xlu0 %557
        %559 = vrot.lane.b32.xlu0 %v477, 16
        %v560 = vpop.permute.xlu0 %559
        %561 = vrot.lane.b32.xlu0 %v478, 16
        %v562 = vpop.permute.xlu0 %561
        %563 = vrot.lane.b32.xlu0 %v479, 16
        %v564 = vpop.permute.xlu0 %563
        %565 = vrot.lane.b32.xlu0 %v480, 16
        %v566 = vpop.permute.xlu0 %565
        %vm567 = vcmask 130048
        %v568 = vsel %vm567, %v552, %v554
        %v569 = vsel %vm567, %v556, %v558
        %v570 = vsel %vm567, %v560, %v562
        %v571 = vsel %vm567, %v564, %v566
        %vm576 = vcmask 130048
        %v578 = vsel %vm576, 0, %v552
        %v581 = vsel %vm576, 0, %v556
        %v584 = vsel %vm576, 0, %v560
        %v587 = vsel %vm576, 0, %v564
        %589 = vrot.lane.b32.xlu0 %v410, 16
        %v590 = vpop.permute.xlu0 %589
        %591 = vrot.lane.b32.xlu0 %v411, 16
        %v592 = vpop.permute.xlu0 %591
        %593 = vrot.lane.b32.xlu0 %v412, 16
        %v594 = vpop.permute.xlu0 %593
        %595 = vrot.lane.b32.xlu0 %v413, 16
        %v596 = vpop.permute.xlu0 %595
        %597 = vrot.lane.b32.xlu0 %v414, 16
        %v598 = vpop.permute.xlu0 %597
        %599 = vrot.lane.b32.xlu0 %v415, 16
        %v600 = vpop.permute.xlu0 %599
        %601 = vrot.lane.b32.xlu0 %v416, 16
        %v602 = vpop.permute.xlu0 %601
        %603 = vrot.lane.b32.xlu0 %v417, 16
        %v604 = vpop.permute.xlu0 %603
        %v605 = vsel %vm567, %v590, %v592
        %v606 = vsel %vm567, %v594, %v596
        %v607 = vsel %vm567, %v598, %v600
        %v608 = vsel %vm567, %v602, %v604
        %v614 = vsel %vm576, 0, %v590
        %v617 = vsel %vm576, 0, %v594
        %v620 = vsel %vm576, 0, %v598
        %v623 = vsel %vm576, 0, %v602
        %633 = vrot.lane.b32.xlu0 %v535, 16
        %v634 = vpop.permute.xlu0 %633
        %635 = vrot.lane.b32.xlu0 %v536, 16
        %v636 = vpop.permute.xlu0 %635
        %637 = vrot.lane.b32.xlu0 %v537, 16
        %v638 = vpop.permute.xlu0 %637
        %639 = vrot.lane.b32.xlu0 %v538, 16
        %v640 = vpop.permute.xlu0 %639
        %641 = vrot.lane.b32.xlu0 %v539, 16
        %v642 = vpop.permute.xlu0 %641
        %643 = vrot.lane.b32.xlu0 %v540, 16
        %v644 = vpop.permute.xlu0 %643
        %645 = vrot.lane.b32.xlu0 %v541, 16
        %v646 = vpop.permute.xlu0 %645
        %647 = vrot.lane.b32.xlu0 %v542, 16
        %v648 = vpop.permute.xlu0 %647
        %v649 = vsel %vm567, %v634, %v636
        %v650 = vsel %vm567, %v638, %v640
        %v651 = vsel %vm567, %v642, %v644
        %v652 = vsel %vm567, %v646, %v648
        %v658 = vsel %vm576, 0, %v634
        %v661 = vsel %vm576, 0, %v638
        %v664 = vsel %vm576, 0, %v642
        %v667 = vsel %vm576, 0, %v646
        %669 = vrot.lane.b32.xlu0 %v473, 112
        %v670 = vpop.permute.xlu0 %669
        %671 = vrot.lane.b32.xlu0 %v474, 112
        %v672 = vpop.permute.xlu0 %671
        %673 = vrot.lane.b32.xlu0 %v475, 112
        %v674 = vpop.permute.xlu0 %673
        %675 = vrot.lane.b32.xlu0 %v476, 112
        %v676 = vpop.permute.xlu0 %675
        %677 = vrot.lane.b32.xlu0 %v477, 112
        %v678 = vpop.permute.xlu0 %677
        %679 = vrot.lane.b32.xlu0 %v478, 112
        %v680 = vpop.permute.xlu0 %679
        %681 = vrot.lane.b32.xlu0 %v479, 112
        %v682 = vpop.permute.xlu0 %681
        %683 = vrot.lane.b32.xlu0 %v480, 112
        %v684 = vpop.permute.xlu0 %683
        %vm685 = vcmask 916480
        %v686 = vsel %vm685, %v670, %v672
        %v687 = vsel %vm685, %v674, %v676
        %v688 = vsel %vm685, %v678, %v680
        %v689 = vsel %vm685, %v682, %v684
        %vm694 = vcmask 916480
        %v696 = vsel %vm694, %v672, 0
        %v699 = vsel %vm694, %v676, 0
        %v702 = vsel %vm694, %v680, 0
        %v705 = vsel %vm694, %v684, 0
        %707 = vrot.lane.b32.xlu0 %v410, 112
        %v708 = vpop.permute.xlu0 %707
        %709 = vrot.lane.b32.xlu0 %v411, 112
        %v710 = vpop.permute.xlu0 %709
        %711 = vrot.lane.b32.xlu0 %v412, 112
        %v712 = vpop.permute.xlu0 %711
        %713 = vrot.lane.b32.xlu0 %v413, 112
        %v714 = vpop.permute.xlu0 %713
        %715 = vrot.lane.b32.xlu0 %v414, 112
        %v716 = vpop.permute.xlu0 %715
        %717 = vrot.lane.b32.xlu0 %v415, 112
        %v718 = vpop.permute.xlu0 %717
        %719 = vrot.lane.b32.xlu0 %v416, 112
        %v720 = vpop.permute.xlu0 %719
        %721 = vrot.lane.b32.xlu0 %v417, 112
        %v722 = vpop.permute.xlu0 %721
        %v723 = vsel %vm685, %v708, %v710
        %v724 = vsel %vm685, %v712, %v714
        %v725 = vsel %vm685, %v716, %v718
        %v726 = vsel %vm685, %v720, %v722
        %v732 = vsel %vm694, %v710, 0
        %v735 = vsel %vm694, %v714, 0
        %v738 = vsel %vm694, %v718, 0
        %v741 = vsel %vm694, %v722, 0
        %743 = vrot.lane.b32.xlu0 %v535, 112
        %v744 = vpop.permute.xlu0 %743
        %745 = vrot.lane.b32.xlu0 %v536, 112
        %v746 = vpop.permute.xlu0 %745
        %747 = vrot.lane.b32.xlu0 %v537, 112
        %v748 = vpop.permute.xlu0 %747
        %749 = vrot.lane.b32.xlu0 %v538, 112
        %v750 = vpop.permute.xlu0 %749
        %751 = vrot.lane.b32.xlu0 %v539, 112
        %v752 = vpop.permute.xlu0 %751
        %753 = vrot.lane.b32.xlu0 %v540, 112
        %v754 = vpop.permute.xlu0 %753
        %755 = vrot.lane.b32.xlu0 %v541, 112
        %v756 = vpop.permute.xlu0 %755
        %757 = vrot.lane.b32.xlu0 %v542, 112
        %v758 = vpop.permute.xlu0 %757
        %v759 = vsel %vm685, %v744, %v746
        %v760 = vsel %vm685, %v748, %v750
        %v761 = vsel %vm685, %v752, %v754
        %v762 = vsel %vm685, %v756, %v758
        %v768 = vsel %vm694, %v746, 0
        %v771 = vsel %vm694, %v750, 0
        %v774 = vsel %vm694, %v754, 0
        %v777 = vsel %vm694, %v758, 0
        %788 = vset.pattern.permute.xlu0 0
        %789 = vperm.xlu0 %788, %v378
        %v790 = vpop.permute.xlu0 %789
        %793 = vset.pattern.permute.xlu0 0
        %794 = vperm.xlu0 %793, %v379
        %v795 = vpop.permute.xlu0 %794
        %798 = vset.pattern.permute.xlu0 0
        %799 = vperm.xlu0 %798, %v380
        %v800 = vpop.permute.xlu0 %799
        %803 = vset.pattern.permute.xlu0 0
        %804 = vperm.xlu0 %803, %v381
        %v805 = vpop.permute.xlu0 %804
        %808 = vset.pattern.permute.xlu0 0
        %809 = vperm.xlu0 %808, %v382
        %v810 = vpop.permute.xlu0 %809
        %813 = vset.pattern.permute.xlu0 0
        %814 = vperm.xlu0 %813, %v383
        %v815 = vpop.permute.xlu0 %814
        %818 = vset.pattern.permute.xlu0 0
        %819 = vperm.xlu0 %818, %v384
        %v820 = vpop.permute.xlu0 %819
        %823 = vset.pattern.permute.xlu0 0
        %824 = vperm.xlu0 %823, %v385
        %v825 = vpop.permute.xlu0 %824
        %v851 = vunpack.c.l.b16 %v354
        %v852 = vunpack.c.h.b16 %v354
        %v853 = vunpack.c.l.b16 %v355
        %v854 = vunpack.c.h.b16 %v355
        %v855 = vunpack.c.l.b16 %v356
        %v856 = vunpack.c.l.b16 %v357
        %v857 = vunpack.c.h.b16 %v357
        %v858 = vunpack.c.l.b16 %v358
        %v859 = vunpack.c.h.b16 %v358
        %v860 = vunpack.c.l.b16 %v359
        %v861 = vunpack.c.l.b16 %v360
        %v862 = vunpack.c.h.b16 %v360
        %v863 = vunpack.c.l.b16 %v361
        %v864 = vunpack.c.h.b16 %v361
        %v865 = vunpack.c.l.b16 %v362
        %v866 = vunpack.c.l.b16 %v363
        %v867 = vunpack.c.h.b16 %v363
        %v868 = vunpack.c.l.b16 %v364
        %v869 = vunpack.c.h.b16 %v364
        %v870 = vunpack.c.l.b16 %v365
        %v871 = vunpack.c.l.b16 %v366
        %v872 = vunpack.c.h.b16 %v366
        %v873 = vunpack.c.l.b16 %v367
        %v874 = vunpack.c.h.b16 %v367
        %v875 = vunpack.c.l.b16 %v368
        %v876 = vunpack.c.l.b16 %v369
        %v877 = vunpack.c.h.b16 %v369
        %v878 = vunpack.c.l.b16 %v370
        %v879 = vunpack.c.h.b16 %v370
        %v880 = vunpack.c.l.b16 %v371
        %v881 = vunpack.c.l.b16 %v372
        %v882 = vunpack.c.h.b16 %v372
        %v883 = vunpack.c.l.b16 %v373
        %v884 = vunpack.c.h.b16 %v373
        %v885 = vunpack.c.l.b16 %v374
        %v886 = vunpack.c.l.b16 %v375
        %v887 = vunpack.c.h.b16 %v375
        %v888 = vunpack.c.l.b16 %v376
        %v889 = vunpack.c.h.b16 %v376
        %v890 = vunpack.c.l.b16 %v377
        %v891 = vpack.c.b16 %v856, %v851
        %v892 = vpack.c.b16 %v857, %v852
        %v893 = vpack.c.b16 %v858, %v853
        %v894 = vpack.c.b16 %v859, %v854
        %v895 = vpack.c.b16 %v860, %v855
        %v896 = vpack.c.b16 %v866, %v861
        %v897 = vpack.c.b16 %v867, %v862
        %v898 = vpack.c.b16 %v868, %v863
        %v899 = vpack.c.b16 %v869, %v864
        %v900 = vpack.c.b16 %v870, %v865
        %v901 = vpack.c.b16 %v876, %v871
        %v902 = vpack.c.b16 %v877, %v872
        %v903 = vpack.c.b16 %v878, %v873
        %v904 = vpack.c.b16 %v879, %v874
        %v905 = vpack.c.b16 %v880, %v875
        %v906 = vpack.c.b16 %v886, %v881
        %v907 = vpack.c.b16 %v887, %v882
        %v908 = vpack.c.b16 %v888, %v883
        %v909 = vpack.c.b16 %v889, %v884
        %v910 = vpack.c.b16 %v890, %v885
        %vm927 = vcmask 523264
        %v929 = vsel %vm927, %v895, 0
        %v932 = vsel %vm927, %v900, 0
        %v935 = vsel %vm927, %v905, 0
        %v938 = vsel %vm927, %v910, 0
        %940 = vmatprep.subr.bf16.mxu0 %v608
        %941 = vmatpush1.bf16.msra.mxu0 %v623
        %942 = vmatprep.subr.bf16.mxu0 %v607
        %943 = vmatpush1.bf16.msra.mxu0 %v620
        %944 = vmatprep.subr.bf16.mxu0 %v606
        %945 = vmatpush1.bf16.msra.mxu0 %v617
        %946 = vmatprep.subr.bf16.mxu0 %v605
        %947 = vmatpush1.bf16.msra.mxu0 %v614
        %948 = vmatprep.subr.bf16.mxu0 %v571
        %949 = vmatpush1.bf16.msra.mxu0 %v587
        %950 = vmatprep.subr.bf16.mxu0 %v570
        %951 = vmatpush1.bf16.msra.mxu0 %v584
        %952 = vmatprep.subr.bf16.mxu0 %v569
        %953 = vmatpush1.bf16.msra.mxu0 %v581
        %954 = vmatprep.subr.bf16.mxu0 %v568
        %955 = vmatpush1.bf16.msra.mxu0 %v578
        %956 = vmatprep.subr.bf16.mxu0 %v480
        %957 = vmatpush2.bf16.msra.mxu0 %v479
        %958 = vmatprep.subr.bf16.mxu0 %v478
        %959 = vmatpush2.bf16.msra.mxu0 %v477
        %960 = vmatprep.subr.bf16.mxu0 %v476
        %961 = vmatpush2.bf16.msra.mxu0 %v475
        %962 = vmatprep.subr.bf16.mxu0 %v474
        %963 = vmatpush2.bf16.msra.mxu0 %v473
        %964 = vmatprep.subr.bf16.mxu0 %v652
        %965 = vmatpush2.bf16.msra.mxu0 %v667
        %966 = vmatprep.subr.bf16.mxu0 %v651
        %967 = vmatpush2.bf16.msra.mxu0 %v664
        %968 = vmatprep.subr.bf16.mxu0 %v650
        %969 = vmatpush2.bf16.msra.mxu0 %v661
        %970 = vmatprep.subr.bf16.mxu0 %v649
        %971 = vmatpush2.bf16.msra.mxu0 %v658
        %972 = vmatprep.mubr.bf16.mxu0 %v892
        %973 = vmatmul.mubr.bf16.gmra.mxu0 %v891
        %v974 = vpop.f32.mrf.mxu0
        %v975 = vadd.f32 %v790, %v974
        %v976 = vpop.f32.mrf.mxu0
        %v977 = vadd.f32 %v790, %v976
        %v978 = vpop.f32.mrf.mxu0
        %v979 = vadd.f32 %v795, %v978
        %v980 = vpop.f32.mrf.mxu0
        %v981 = vadd.f32 %v795, %v980
        %982 = vmatprep.mubr.bf16.mxu0 %v897
        %983 = vmatmul.mubr.bf16.gmra.mxu0 %v896
        %v984 = vpop.f32.mrf.mxu0
        %v985 = vadd.f32 %v800, %v984
        %v986 = vpop.f32.mrf.mxu0
        %v987 = vadd.f32 %v800, %v986
        %v988 = vpop.f32.mrf.mxu0
        %v989 = vadd.f32 %v805, %v988
        %v990 = vpop.f32.mrf.mxu0
        %v991 = vadd.f32 %v805, %v990
        %992 = vmatprep.mubr.bf16.mxu0 %v902
        %993 = vmatmul.mubr.bf16.gmra.mxu0 %v901
        %v994 = vpop.f32.mrf.mxu0
        %v995 = vadd.f32 %v810, %v994
        %v996 = vpop.f32.mrf.mxu0
        %v997 = vadd.f32 %v810, %v996
        %v998 = vpop.f32.mrf.mxu0
        %v999 = vadd.f32 %v815, %v998
        %v1000 = vpop.f32.mrf.mxu0
        %v1001 = vadd.f32 %v815, %v1000
        %1002 = vmatprep.mubr.bf16.mxu0 %v907
        %1003 = vmatmul.mubr.bf16.gmra.mxu0 %v906
        %v1004 = vpop.f32.mrf.mxu0
        %v1005 = vadd.f32 %v820, %v1004
        %v1006 = vpop.f32.mrf.mxu0
        %v1007 = vadd.f32 %v820, %v1006
        %v1008 = vpop.f32.mrf.mxu0
        %v1009 = vadd.f32 %v825, %v1008
        %v1010 = vpop.f32.mrf.mxu0
        %v1011 = vadd.f32 %v825, %v1010
        %1012 = vdwg.mxu0
        %1013 = vmatprep.subr.bf16.mxu0 %v542
        %1014 = vmatpush1.bf16.msra.mxu0 %v541
        %1015 = vmatprep.subr.bf16.mxu0 %v540
        %1016 = vmatpush1.bf16.msra.mxu0 %v539
        %1017 = vmatprep.subr.bf16.mxu0 %v538
        %1018 = vmatpush1.bf16.msra.mxu0 %v537
        %1019 = vmatprep.subr.bf16.mxu0 %v536
        %1020 = vmatpush1.bf16.msra.mxu0 %v535
        %1021 = vmatprep.subr.bf16.mxu0 %v417
        %1022 = vmatpush1.bf16.msra.mxu0 %v416
        %1023 = vmatprep.subr.bf16.mxu0 %v415
        %1024 = vmatpush1.bf16.msra.mxu0 %v414
        %1025 = vmatprep.subr.bf16.mxu0 %v413
        %1026 = vmatpush1.bf16.msra.mxu0 %v412
        %1027 = vmatprep.subr.bf16.mxu0 %v411
        %1028 = vmatpush1.bf16.msra.mxu0 %v410
        %1029 = vmatprep.subr.bf16.mxu0 %v741
        %1030 = vmatpush2.bf16.msra.mxu0 %v726
        %1031 = vmatprep.subr.bf16.mxu0 %v738
        %1032 = vmatpush2.bf16.msra.mxu0 %v725
        %1033 = vmatprep.subr.bf16.mxu0 %v735
        %1034 = vmatpush2.bf16.msra.mxu0 %v724
        %1035 = vmatprep.subr.bf16.mxu0 %v732
        %1036 = vmatpush2.bf16.msra.mxu0 %v723
        %1037 = vmatprep.subr.bf16.mxu0 %v705
        %1038 = vmatpush2.bf16.msra.mxu0 %v689
        %1039 = vmatprep.subr.bf16.mxu0 %v702
        %1040 = vmatpush2.bf16.msra.mxu0 %v688
        %1041 = vmatprep.subr.bf16.mxu0 %v699
        %1042 = vmatpush2.bf16.msra.mxu0 %v687
        %1043 = vmatprep.subr.bf16.mxu0 %v696
        %1044 = vmatpush2.bf16.msra.mxu0 %v686
        %1045 = vmatprep.mubr.bf16.mxu0 %v894
        %1046 = vmatmul.mubr.bf16.gmra.mxu0 %v893
        %v1047 = vpop.f32.mrf.mxu0
        %v1048 = vadd.f32 %v975, %v1047
        %v1049 = vpop.f32.mrf.mxu0
        %v1050 = vadd.f32 %v977, %v1049
        %v1051 = vpop.f32.mrf.mxu0
        %v1052 = vadd.f32 %v979, %v1051
        %v1053 = vpop.f32.mrf.mxu0
        %v1054 = vadd.f32 %v981, %v1053
        %1055 = vmatprep.mubr.bf16.mxu0 %v899
        %1056 = vmatmul.mubr.bf16.gmra.mxu0 %v898
        %v1057 = vpop.f32.mrf.mxu0
        %v1058 = vadd.f32 %v985, %v1057
        %v1059 = vpop.f32.mrf.mxu0
        %v1060 = vadd.f32 %v987, %v1059
        %v1061 = vpop.f32.mrf.mxu0
        %v1062 = vadd.f32 %v989, %v1061
        %v1063 = vpop.f32.mrf.mxu0
        %v1064 = vadd.f32 %v991, %v1063
        %1065 = vmatprep.mubr.bf16.mxu0 %v904
        %1066 = vmatmul.mubr.bf16.gmra.mxu0 %v903
        %v1067 = vpop.f32.mrf.mxu0
        %v1068 = vadd.f32 %v995, %v1067
        %v1069 = vpop.f32.mrf.mxu0
        %v1070 = vadd.f32 %v997, %v1069
        %v1071 = vpop.f32.mrf.mxu0
        %v1072 = vadd.f32 %v999, %v1071
        %v1073 = vpop.f32.mrf.mxu0
        %v1074 = vadd.f32 %v1001, %v1073
        %1075 = vmatprep.mubr.bf16.mxu0 %v909
        %1076 = vmatmul.mubr.bf16.gmra.mxu0 %v908
        %v1077 = vpop.f32.mrf.mxu0
        %v1078 = vadd.f32 %v1005, %v1077
        %v1079 = vpop.f32.mrf.mxu0
        %v1080 = vadd.f32 %v1007, %v1079
        %v1081 = vpop.f32.mrf.mxu0
        %v1082 = vadd.f32 %v1009, %v1081
        %v1083 = vpop.f32.mrf.mxu0
        %v1084 = vadd.f32 %v1011, %v1083
        %1085 = vdwg.mxu0
        %1086 = vmatprep.subr.bf16.mxu0 0
        %1087 = vmatpush1.bf16.msra.mxu0 0
        %1088 = vmatprep.subr.bf16.mxu0 0
        %1089 = vmatpush1.bf16.msra.mxu0 0
        %1090 = vmatprep.subr.bf16.mxu0 0
        %1091 = vmatpush1.bf16.msra.mxu0 0
        %1092 = vmatprep.subr.bf16.mxu0 0
        %1093 = vmatpush1.bf16.msra.mxu0 0
        %1094 = vmatprep.subr.bf16.mxu0 %v777
        %1095 = vmatpush1.bf16.msra.mxu0 %v762
        %1096 = vmatprep.subr.bf16.mxu0 %v774
        %1097 = vmatpush1.bf16.msra.mxu0 %v761
        %1098 = vmatprep.subr.bf16.mxu0 %v771
        %1099 = vmatpush1.bf16.msra.mxu0 %v760
        %1100 = vmatprep.subr.bf16.mxu0 %v768
        %1101 = vmatpush1.bf16.msra.mxu0 %v759
        %1102 = vmatprep.subr.bf16.mxu0 0
        %1103 = vmatpush2.bf16.msra.mxu0 0
        %1104 = vmatprep.subr.bf16.mxu0 0
        %1105 = vmatpush2.bf16.msra.mxu0 0
        %1106 = vmatprep.subr.bf16.mxu0 0
        %1107 = vmatpush2.bf16.msra.mxu0 0
        %1108 = vmatprep.subr.bf16.mxu0 0
        %1109 = vmatpush2.bf16.msra.mxu0 0
        %1110 = vmatprep.subr.bf16.mxu0 0
        %1111 = vmatpush2.bf16.msra.mxu0 0
        %1112 = vmatprep.subr.bf16.mxu0 0
        %1113 = vmatpush2.bf16.msra.mxu0 0
        %1114 = vmatprep.subr.bf16.mxu0 0
        %1115 = vmatpush2.bf16.msra.mxu0 0
        %1116 = vmatprep.subr.bf16.mxu0 0
        %1117 = vmatpush2.bf16.msra.mxu0 0
        %1118 = vmatprep.mubr.bf16.mxu0 0
        %1119 = vmatmul.mubr.bf16.gmra.mxu0 %v929
        %v1120 = vpop.f32.mrf.mxu0
        %v1121 = vadd.f32 %v1048, %v1120
        %v1122 = vpop.f32.mrf.mxu0
        %v1123 = vadd.f32 %v1050, %v1122
        %v1124 = vpop.f32.mrf.mxu0
        %v1125 = vadd.f32 %v1052, %v1124
        %v1126 = vpop.f32.mrf.mxu0
        %v1127 = vadd.f32 %v1054, %v1126
        %1128 = vmatprep.mubr.bf16.mxu0 0
        %1129 = vmatmul.mubr.bf16.gmra.mxu0 %v932
        %v1130 = vpop.f32.mrf.mxu0
        %v1131 = vadd.f32 %v1058, %v1130
        %v1132 = vpop.f32.mrf.mxu0
        %v1133 = vadd.f32 %v1060, %v1132
        %v1134 = vpop.f32.mrf.mxu0
        %v1135 = vadd.f32 %v1062, %v1134
        %v1136 = vpop.f32.mrf.mxu0
        %v1137 = vadd.f32 %v1064, %v1136
        %1138 = vmatprep.mubr.bf16.mxu0 0
        %1139 = vmatmul.mubr.bf16.gmra.mxu0 %v935
        %v1140 = vpop.f32.mrf.mxu0
        %v1141 = vadd.f32 %v1068, %v1140
        %v1142 = vpop.f32.mrf.mxu0
        %v1143 = vadd.f32 %v1070, %v1142
        %v1144 = vpop.f32.mrf.mxu0
        %v1145 = vadd.f32 %v1072, %v1144
        %v1146 = vpop.f32.mrf.mxu0
        %v1147 = vadd.f32 %v1074, %v1146
        %1148 = vmatprep.mubr.bf16.mxu0 0
        %1149 = vmatmul.mubr.bf16.gmra.mxu0 %v938
        %v1150 = vpop.f32.mrf.mxu0
        %v1151 = vadd.f32 %v1078, %v1150
        %v1152 = vpop.f32.mrf.mxu0
        %v1153 = vadd.f32 %v1080, %v1152
        %v1154 = vpop.f32.mrf.mxu0
        %v1155 = vadd.f32 %v1082, %v1154
        %v1156 = vpop.f32.mrf.mxu0
        %v1157 = vadd.f32 %v1084, %v1156
        %1158 = vdwg.mxu0
        %v1159 = vmul.f32 %v1121, 0.2
        %v1160 = vmul.f32 %v1123, 0.2
        %v1161 = vmul.f32 %v1125, 0.2
        %v1162 = vmul.f32 %v1127, 0.2
        %v1163 = vmul.f32 %v1131, 0.2
        %v1164 = vmul.f32 %v1133, 0.2
        %v1165 = vmul.f32 %v1135, 0.2
        %v1166 = vmul.f32 %v1137, 0.2
        %v1167 = vmul.f32 %v1141, 0.2
        %v1168 = vmul.f32 %v1143, 0.2
        %v1169 = vmul.f32 %v1145, 0.2
        %v1170 = vmul.f32 %v1147, 0.2
        %v1171 = vmul.f32 %v1151, 0.2
        %v1172 = vmul.f32 %v1153, 0.2
        %v1173 = vmul.f32 %v1155, 0.2
        %v1174 = vmul.f32 %v1157, 0.2
        %v1175 = vmax.f32 %v1121, %v1159
        %v1176 = vmax.f32 %v1123, %v1160
        %v1177 = vmax.f32 %v1125, %v1161
        %v1178 = vmax.f32 %v1127, %v1162
        %v1179 = vmax.f32 %v1131, %v1163
        %v1180 = vmax.f32 %v1133, %v1164
        %v1181 = vmax.f32 %v1135, %v1165
        %v1182 = vmax.f32 %v1137, %v1166
        %v1183 = vmax.f32 %v1141, %v1167
        %v1184 = vmax.f32 %v1143, %v1168
        %v1185 = vmax.f32 %v1145, %v1169
        %v1186 = vmax.f32 %v1147, %v1170
        %v1187 = vmax.f32 %v1151, %v1171
        %v1188 = vmax.f32 %v1153, %v1172
        %v1189 = vmax.f32 %v1155, %v1173
        %v1190 = vmax.f32 %v1157, %v1174
        %v1191 = vpack.c.bf16 %v1177, %v1175
        %v1192 = vpack.c.bf16 %v1178, %v1176
        %v1193 = vpack.c.bf16 %v1181, %v1179
        %v1194 = vpack.c.bf16 %v1182, %v1180
        %v1195 = vpack.c.bf16 %v1185, %v1183
        %v1196 = vpack.c.bf16 %v1186, %v1184
        %v1197 = vpack.c.bf16 %v1189, %v1187
        %v1198 = vpack.c.bf16 %v1190, %v1188
        %v1199 = vld [vmem:[%s2] sm:$0xff]
        %v1200 = vld [vmem:[%s2 + $0x8] sm:$0xff]
        %v1201 = vld [vmem:[%s2 + $0x10] sm:$0xf]
        %v1202 = vld [vmem:[%s2 + $0x14] sm:$0xff]
        %v1203 = vld [vmem:[%s2 + $0x1c] sm:$0xff]
        %v1204 = vld [vmem:[%s2 + $0x24] sm:$0xf]
        %v1205 = vld [vmem:[%s2 + $0x28] sm:$0xff]
        %v1206 = vld [vmem:[%s2 + $0x30] sm:$0xff]
        %v1207 = vld [vmem:[%s2 + $0x38] sm:$0xf]
        %v1208 = vld [vmem:[%s2 + $0x3c] sm:$0xff]
        %v1209 = vld [vmem:[%s2 + $0x44] sm:$0xff]
        %v1210 = vld [vmem:[%s2 + $0x4c] sm:$0xf]
        %v1211 = vld [vmem:[%s5] sm:$0xff]
        %v1212 = vld [vmem:[%s5 + $0x8] sm:$0xff]
        %v1213 = vld [vmem:[%s5 + $0x10] sm:$0xff]
        %v1214 = vld [vmem:[%s5 + $0x18] sm:$0xff]
        %1223 = vrot.lane.b32.xlu0 %v1191, 1
        %v1224 = vpop.permute.xlu0 %1223
        %1225 = vrot.lane.b32.xlu0 %v1192, 1
        %v1226 = vpop.permute.xlu0 %1225
        %1227 = vrot.lane.b32.xlu0 %v1193, 1
        %v1228 = vpop.permute.xlu0 %1227
        %1229 = vrot.lane.b32.xlu0 %v1194, 1
        %v1230 = vpop.permute.xlu0 %1229
        %1231 = vrot.lane.b32.xlu0 %v1195, 1
        %v1232 = vpop.permute.xlu0 %1231
        %1233 = vrot.lane.b32.xlu0 %v1196, 1
        %v1234 = vpop.permute.xlu0 %1233
        %1235 = vrot.lane.b32.xlu0 %v1197, 1
        %v1236 = vpop.permute.xlu0 %1235
        %1237 = vrot.lane.b32.xlu0 %v1198, 1
        %v1238 = vpop.permute.xlu0 %1237
        %v1239 = vsel %vm434, %v1224, %v1226
        %v1240 = vsel %vm434, %v1228, %v1230
        %v1241 = vsel %vm434, %v1232, %v1234
        %v1242 = vsel %vm434, %v1236, %v1238
        %v1248 = vsel %vm443, 0, %v1224
        %v1251 = vsel %vm443, 0, %v1228
        %v1254 = vsel %vm443, 0, %v1232
        %v1257 = vsel %vm443, 0, %v1236
        %v1259 = vsel %vm471, %v1248, 0
        %v1260 = vsel %vm472, %v1239, 0
        %v1261 = vsel %vm471, %v1251, 0
        %v1262 = vsel %vm472, %v1240, 0
        %v1263 = vsel %vm471, %v1254, 0
        %v1264 = vsel %vm472, %v1241, 0
        %v1265 = vsel %vm471, %v1257, 0
        %v1266 = vsel %vm472, %v1242, 0
        %1267 = vrot.lane.b32.xlu0 %v1191, 127
        %v1268 = vpop.permute.xlu0 %1267
        %1269 = vrot.lane.b32.xlu0 %v1192, 127
        %v1270 = vpop.permute.xlu0 %1269
        %1271 = vrot.lane.b32.xlu0 %v1193, 127
        %v1272 = vpop.permute.xlu0 %1271
        %1273 = vrot.lane.b32.xlu0 %v1194, 127
        %v1274 = vpop.permute.xlu0 %1273
        %1275 = vrot.lane.b32.xlu0 %v1195, 127
        %v1276 = vpop.permute.xlu0 %1275
        %1277 = vrot.lane.b32.xlu0 %v1196, 127
        %v1278 = vpop.permute.xlu0 %1277
        %1279 = vrot.lane.b32.xlu0 %v1197, 127
        %v1280 = vpop.permute.xlu0 %1279
        %1281 = vrot.lane.b32.xlu0 %v1198, 127
        %v1282 = vpop.permute.xlu0 %1281
        %v1283 = vsel %vm497, %v1268, %v1270
        %v1284 = vsel %vm497, %v1272, %v1274
        %v1285 = vsel %vm497, %v1276, %v1278
        %v1286 = vsel %vm497, %v1280, %v1282
        %v1292 = vsel %vm506, %v1270, 0
        %v1295 = vsel %vm506, %v1274, 0
        %v1298 = vsel %vm506, %v1278, 0
        %v1301 = vsel %vm506, %v1282, 0
        %v1303 = vsel %vm533, %v1283, 0
        %v1304 = vsel %vm534, %v1292, 0
        %v1305 = vsel %vm533, %v1284, 0
        %v1306 = vsel %vm534, %v1295, 0
        %v1307 = vsel %vm533, %v1285, 0
        %v1308 = vsel %vm534, %v1298, 0
        %v1309 = vsel %vm533, %v1286, 0
        %v1310 = vsel %vm534, %v1301, 0
        %1319 = vrot.lane.b32.xlu0 %v1259, 16
        %v1320 = vpop.permute.xlu0 %1319
        %1321 = vrot.lane.b32.xlu0 %v1260, 16
        %v1322 = vpop.permute.xlu0 %1321
        %1323 = vrot.lane.b32.xlu0 %v1261, 16
        %v1324 = vpop.permute.xlu0 %1323
        %1325 = vrot.lane.b32.xlu0 %v1262, 16
        %v1326 = vpop.permute.xlu0 %1325
        %1327 = vrot.lane.b32.xlu0 %v1263, 16
        %v1328 = vpop.permute.xlu0 %1327
        %1329 = vrot.lane.b32.xlu0 %v1264, 16
        %v1330 = vpop.permute.xlu0 %1329
        %1331 = vrot.lane.b32.xlu0 %v1265, 16
        %v1332 = vpop.permute.xlu0 %1331
        %1333 = vrot.lane.b32.xlu0 %v1266, 16
        %v1334 = vpop.permute.xlu0 %1333
        %v1335 = vsel %vm567, %v1320, %v1322
        %v1336 = vsel %vm567, %v1324, %v1326
        %v1337 = vsel %vm567, %v1328, %v1330
        %v1338 = vsel %vm567, %v1332, %v1334
        %v1344 = vsel %vm576, 0, %v1320
        %v1347 = vsel %vm576, 0, %v1324
        %v1350 = vsel %vm576, 0, %v1328
        %v1353 = vsel %vm576, 0, %v1332
        %1355 = vrot.lane.b32.xlu0 %v1191, 16
        %v1356 = vpop.permute.xlu0 %1355
        %1357 = vrot.lane.b32.xlu0 %v1192, 16
        %v1358 = vpop.permute.xlu0 %1357
        %1359 = vrot.lane.b32.xlu0 %v1193, 16
        %v1360 = vpop.permute.xlu0 %1359
        %1361 = vrot.lane.b32.xlu0 %v1194, 16
        %v1362 = vpop.permute.xlu0 %1361
        %1363 = vrot.lane.b32.xlu0 %v1195, 16
        %v1364 = vpop.permute.xlu0 %1363
        %1365 = vrot.lane.b32.xlu0 %v1196, 16
        %v1366 = vpop.permute.xlu0 %1365
        %1367 = vrot.lane.b32.xlu0 %v1197, 16
        %v1368 = vpop.permute.xlu0 %1367
        %1369 = vrot.lane.b32.xlu0 %v1198, 16
        %v1370 = vpop.permute.xlu0 %1369
        %v1371 = vsel %vm567, %v1356, %v1358
        %v1372 = vsel %vm567, %v1360, %v1362
        %v1373 = vsel %vm567, %v1364, %v1366
        %v1374 = vsel %vm567, %v1368, %v1370
        %v1380 = vsel %vm576, 0, %v1356
        %v1383 = vsel %vm576, 0, %v1360
        %v1386 = vsel %vm576, 0, %v1364
        %v1389 = vsel %vm576, 0, %v1368
        %1399 = vrot.lane.b32.xlu0 %v1303, 16
        %v1400 = vpop.permute.xlu0 %1399
        %1401 = vrot.lane.b32.xlu0 %v1304, 16
        %v1402 = vpop.permute.xlu0 %1401
        %1403 = vrot.lane.b32.xlu0 %v1305, 16
        %v1404 = vpop.permute.xlu0 %1403
        %1405 = vrot.lane.b32.xlu0 %v1306, 16
        %v1406 = vpop.permute.xlu0 %1405
        %1407 = vrot.lane.b32.xlu0 %v1307, 16
        %v1408 = vpop.permute.xlu0 %1407
        %1409 = vrot.lane.b32.xlu0 %v1308, 16
        %v1410 = vpop.permute.xlu0 %1409
        %1411 = vrot.lane.b32.xlu0 %v1309, 16
        %v1412 = vpop.permute.xlu0 %1411
        %1413 = vrot.lane.b32.xlu0 %v1310, 16
        %v1414 = vpop.permute.xlu0 %1413
        %v1415 = vsel %vm567, %v1400, %v1402
        %v1416 = vsel %vm567, %v1404, %v1406
        %v1417 = vsel %vm567, %v1408, %v1410
        %v1418 = vsel %vm567, %v1412, %v1414
        %v1424 = vsel %vm576, 0, %v1400
        %v1427 = vsel %vm576, 0, %v1404
        %v1430 = vsel %vm576, 0, %v1408
        %v1433 = vsel %vm576, 0, %v1412
        %1435 = vrot.lane.b32.xlu0 %v1259, 112
        %v1436 = vpop.permute.xlu0 %1435
        %1437 = vrot.lane.b32.xlu0 %v1260, 112
        %v1438 = vpop.permute.xlu0 %1437
        %1439 = vrot.lane.b32.xlu0 %v1261, 112
        %v1440 = vpop.permute.xlu0 %1439
        %1441 = vrot.lane.b32.xlu0 %v1262, 112
        %v1442 = vpop.permute.xlu0 %1441
        %1443 = vrot.lane.b32.xlu0 %v1263, 112
        %v1444 = vpop.permute.xlu0 %1443
        %1445 = vrot.lane.b32.xlu0 %v1264, 112
        %v1446 = vpop.permute.xlu0 %1445
        %1447 = vrot.lane.b32.xlu0 %v1265, 112
        %v1448 = vpop.permute.xlu0 %1447
        %1449 = vrot.lane.b32.xlu0 %v1266, 112
        %v1450 = vpop.permute.xlu0 %1449
        %v1451 = vsel %vm685, %v1436, %v1438
        %v1452 = vsel %vm685, %v1440, %v1442
        %v1453 = vsel %vm685, %v1444, %v1446
        %v1454 = vsel %vm685, %v1448, %v1450
        %v1460 = vsel %vm694, %v1438, 0
        %v1463 = vsel %vm694, %v1442, 0
        %v1466 = vsel %vm694, %v1446, 0
        %v1469 = vsel %vm694, %v1450, 0
        %1471 = vrot.lane.b32.xlu0 %v1191, 112
        %v1472 = vpop.permute.xlu0 %1471
        %1473 = vrot.lane.b32.xlu0 %v1192, 112
        %v1474 = vpop.permute.xlu0 %1473
        %1475 = vrot.lane.b32.xlu0 %v1193, 112
        %v1476 = vpop.permute.xlu0 %1475
        %1477 = vrot.lane.b32.xlu0 %v1194, 112
        %v1478 = vpop.permute.xlu0 %1477
        %1479 = vrot.lane.b32.xlu0 %v1195, 112
        %v1480 = vpop.permute.xlu0 %1479
        %1481 = vrot.lane.b32.xlu0 %v1196, 112
        %v1482 = vpop.permute.xlu0 %1481
        %1483 = vrot.lane.b32.xlu0 %v1197, 112
        %v1484 = vpop.permute.xlu0 %1483
        %1485 = vrot.lane.b32.xlu0 %v1198, 112
        %v1486 = vpop.permute.xlu0 %1485
        %v1487 = vsel %vm685, %v1472, %v1474
        %v1488 = vsel %vm685, %v1476, %v1478
        %v1489 = vsel %vm685, %v1480, %v1482
        %v1490 = vsel %vm685, %v1484, %v1486
        %v1496 = vsel %vm694, %v1474, 0
        %v1499 = vsel %vm694, %v1478, 0
        %v1502 = vsel %vm694, %v1482, 0
        %v1505 = vsel %vm694, %v1486, 0
        %1507 = vrot.lane.b32.xlu0 %v1303, 112
        %v1508 = vpop.permute.xlu0 %1507
        %1509 = vrot.lane.b32.xlu0 %v1304, 112
        %v1510 = vpop.permute.xlu0 %1509
        %1511 = vrot.lane.b32.xlu0 %v1305, 112
        %v1512 = vpop.permute.xlu0 %1511
        %1513 = vrot.lane.b32.xlu0 %v1306, 112
        %v1514 = vpop.permute.xlu0 %1513
        %1515 = vrot.lane.b32.xlu0 %v1307, 112
        %v1516 = vpop.permute.xlu0 %1515
        %1517 = vrot.lane.b32.xlu0 %v1308, 112
        %v1518 = vpop.permute.xlu0 %1517
        %1519 = vrot.lane.b32.xlu0 %v1309, 112
        %v1520 = vpop.permute.xlu0 %1519
        %1521 = vrot.lane.b32.xlu0 %v1310, 112
        %v1522 = vpop.permute.xlu0 %1521
        %v1523 = vsel %vm685, %v1508, %v1510
        %v1524 = vsel %vm685, %v1512, %v1514
        %v1525 = vsel %vm685, %v1516, %v1518
        %v1526 = vsel %vm685, %v1520, %v1522
        %v1532 = vsel %vm694, %v1510, 0
        %v1535 = vsel %vm694, %v1514, 0
        %v1538 = vsel %vm694, %v1518, 0
        %v1541 = vsel %vm694, %v1522, 0
        %1544 = vset.pattern.permute.xlu0 0
        %1545 = vperm.xlu0 %1544, %v1211
        %v1546 = vpop.permute.xlu0 %1545
        %1549 = vset.pattern.permute.xlu0 0
        %1550 = vperm.xlu0 %1549, %v1212
        %v1551 = vpop.permute.xlu0 %1550
        %1554 = vset.pattern.permute.xlu0 0
        %1555 = vperm.xlu0 %1554, %v1213
        %v1556 = vpop.permute.xlu0 %1555
        %1559 = vset.pattern.permute.xlu0 0
        %1560 = vperm.xlu0 %1559, %v1214
        %v1561 = vpop.permute.xlu0 %1560
        %v1575 = vunpack.c.l.b16 %v1199
        %v1576 = vunpack.c.h.b16 %v1199
        %v1577 = vunpack.c.l.b16 %v1200
        %v1578 = vunpack.c.h.b16 %v1200
        %v1579 = vunpack.c.l.b16 %v1201
        %v1580 = vunpack.c.l.b16 %v1202
        %v1581 = vunpack.c.h.b16 %v1202
        %v1582 = vunpack.c.l.b16 %v1203
        %v1583 = vunpack.c.h.b16 %v1203
        %v1584 = vunpack.c.l.b16 %v1204
        %v1585 = vunpack.c.l.b16 %v1205
        %v1586 = vunpack.c.h.b16 %v1205
        %v1587 = vunpack.c.l.b16 %v1206
        %v1588 = vunpack.c.h.b16 %v1206
        %v1589 = vunpack.c.l.b16 %v1207
        %v1590 = vunpack.c.l.b16 %v1208
        %v1591 = vunpack.c.h.b16 %v1208
        %v1592 = vunpack.c.l.b16 %v1209
        %v1593 = vunpack.c.h.b16 %v1209
        %v1594 = vunpack.c.l.b16 %v1210
        %v1595 = vpack.c.b16 %v1580, %v1575
        %v1596 = vpack.c.b16 %v1581, %v1576
        %v1597 = vpack.c.b16 %v1582, %v1577
        %v1598 = vpack.c.b16 %v1583, %v1578
        %v1599 = vpack.c.b16 %v1584, %v1579
        %v1600 = vpack.c.b16 %v1590, %v1585
        %v1601 = vpack.c.b16 %v1591, %v1586
        %v1602 = vpack.c.b16 %v1592, %v1587
        %v1603 = vpack.c.b16 %v1593, %v1588
        %v1604 = vpack.c.b16 %v1594, %v1589
        %v1614 = vsel %vm927, %v1599, 0
        %v1617 = vsel %vm927, %v1604, 0
        %1619 = vmatprep.subr.bf16.mxu0 %v1374
        %1620 = vmatpush1.bf16.msra.mxu0 %v1389
        %1621 = vmatprep.subr.bf16.mxu0 %v1373
        %1622 = vmatpush1.bf16.msra.mxu0 %v1386
        %1623 = vmatprep.subr.bf16.mxu0 %v1372
        %1624 = vmatpush1.bf16.msra.mxu0 %v1383
        %1625 = vmatprep.subr.bf16.mxu0 %v1371
        %1626 = vmatpush1.bf16.msra.mxu0 %v1380
        %1627 = vmatprep.subr.bf16.mxu0 %v1338
        %1628 = vmatpush1.bf16.msra.mxu0 %v1353
        %1629 = vmatprep.subr.bf16.mxu0 %v1337
        %1630 = vmatpush1.bf16.msra.mxu0 %v1350
        %1631 = vmatprep.subr.bf16.mxu0 %v1336
        %1632 = vmatpush1.bf16.msra.mxu0 %v1347
        %1633 = vmatprep.subr.bf16.mxu0 %v1335
        %1634 = vmatpush1.bf16.msra.mxu0 %v1344
        %1635 = vmatprep.subr.bf16.mxu0 %v1266
        %1636 = vmatpush2.bf16.msra.mxu0 %v1265
        %1637 = vmatprep.subr.bf16.mxu0 %v1264
        %1638 = vmatpush2.bf16.msra.mxu0 %v1263
        %1639 = vmatprep.subr.bf16.mxu0 %v1262
        %1640 = vmatpush2.bf16.msra.mxu0 %v1261
        %1641 = vmatprep.subr.bf16.mxu0 %v1260
        %1642 = vmatpush2.bf16.msra.mxu0 %v1259
        %1643 = vmatprep.subr.bf16.mxu0 %v1418
        %1644 = vmatpush2.bf16.msra.mxu0 %v1433
        %1645 = vmatprep.subr.bf16.mxu0 %v1417
        %1646 = vmatpush2.bf16.msra.mxu0 %v1430
        %1647 = vmatprep.subr.bf16.mxu0 %v1416
        %1648 = vmatpush2.bf16.msra.mxu0 %v1427
        %1649 = vmatprep.subr.bf16.mxu0 %v1415
        %1650 = vmatpush2.bf16.msra.mxu0 %v1424
        %1651 = vmatprep.mubr.bf16.mxu0 %v1596
        %1652 = vmatmul.mubr.bf16.gmra.mxu0 %v1595
        %v1653 = vpop.f32.mrf.mxu0
        %v1654 = vadd.f32 %v1546, %v1653
        %v1655 = vpop.f32.mrf.mxu0
        %v1656 = vadd.f32 %v1546, %v1655
        %v1657 = vpop.f32.mrf.mxu0
        %v1658 = vadd.f32 %v1551, %v1657
        %v1659 = vpop.f32.mrf.mxu0
        %v1660 = vadd.f32 %v1551, %v1659
        %1661 = vmatprep.mubr.bf16.mxu0 %v1601
        %1662 = vmatmul.mubr.bf16.gmra.mxu0 %v1600
        %v1663 = vpop.f32.mrf.mxu0
        %v1664 = vadd.f32 %v1556, %v1663
        %v1665 = vpop.f32.mrf.mxu0
        %v1666 = vadd.f32 %v1556, %v1665
        %v1667 = vpop.f32.mrf.mxu0
        %v1668 = vadd.f32 %v1561, %v1667
        %v1669 = vpop.f32.mrf.mxu0
        %v1670 = vadd.f32 %v1561, %v1669
        %1671 = vdwg.mxu0
        %1672 = vmatprep.subr.bf16.mxu0 %v1310
        %1673 = vmatpush1.bf16.msra.mxu0 %v1309
        %1674 = vmatprep.subr.bf16.mxu0 %v1308
        %1675 = vmatpush1.bf16.msra.mxu0 %v1307
        %1676 = vmatprep.subr.bf16.mxu0 %v1306
        %1677 = vmatpush1.bf16.msra.mxu0 %v1305
        %1678 = vmatprep.subr.bf16.mxu0 %v1304
        %1679 = vmatpush1.bf16.msra.mxu0 %v1303
        %1680 = vmatprep.subr.bf16.mxu0 %v1198
        %1681 = vmatpush1.bf16.msra.mxu0 %v1197
        %1682 = vmatprep.subr.bf16.mxu0 %v1196
        %1683 = vmatpush1.bf16.msra.mxu0 %v1195
        %1684 = vmatprep.subr.bf16.mxu0 %v1194
        %1685 = vmatpush1.bf16.msra.mxu0 %v1193
        %1686 = vmatprep.subr.bf16.mxu0 %v1192
        %1687 = vmatpush1.bf16.msra.mxu0 %v1191
        %1688 = vmatprep.subr.bf16.mxu0 %v1505
        %1689 = vmatpush2.bf16.msra.mxu0 %v1490
        %1690 = vmatprep.subr.bf16.mxu0 %v1502
        %1691 = vmatpush2.bf16.msra.mxu0 %v1489
        %1692 = vmatprep.subr.bf16.mxu0 %v1499
        %1693 = vmatpush2.bf16.msra.mxu0 %v1488
        %1694 = vmatprep.subr.bf16.mxu0 %v1496
        %1695 = vmatpush2.bf16.msra.mxu0 %v1487
        %1696 = vmatprep.subr.bf16.mxu0 %v1469
        %1697 = vmatpush2.bf16.msra.mxu0 %v1454
        %1698 = vmatprep.subr.bf16.mxu0 %v1466
        %1699 = vmatpush2.bf16.msra.mxu0 %v1453
        %1700 = vmatprep.subr.bf16.mxu0 %v1463
        %1701 = vmatpush2.bf16.msra.mxu0 %v1452
        %1702 = vmatprep.subr.bf16.mxu0 %v1460
        %1703 = vmatpush2.bf16.msra.mxu0 %v1451
        %1704 = vmatprep.mubr.bf16.mxu0 %v1598
        %1705 = vmatmul.mubr.bf16.gmra.mxu0 %v1597
        %v1706 = vpop.f32.mrf.mxu0
        %v1707 = vadd.f32 %v1654, %v1706
        %v1708 = vpop.f32.mrf.mxu0
        %v1709 = vadd.f32 %v1656, %v1708
        %v1710 = vpop.f32.mrf.mxu0
        %v1711 = vadd.f32 %v1658, %v1710
        %v1712 = vpop.f32.mrf.mxu0
        %v1713 = vadd.f32 %v1660, %v1712
        %1714 = vmatprep.mubr.bf16.mxu0 %v1603
        %1715 = vmatmul.mubr.bf16.gmra.mxu0 %v1602
        %v1716 = vpop.f32.mrf.mxu0
        %v1717 = vadd.f32 %v1664, %v1716
        %v1718 = vpop.f32.mrf.mxu0
        %v1719 = vadd.f32 %v1666, %v1718
        %v1720 = vpop.f32.mrf.mxu0
        %v1721 = vadd.f32 %v1668, %v1720
        %v1722 = vpop.f32.mrf.mxu0
        %v1723 = vadd.f32 %v1670, %v1722
        %1724 = vdwg.mxu0
        %1725 = vmatprep.subr.bf16.mxu0 0
        %1726 = vmatpush1.bf16.msra.mxu0 0
        %1727 = vmatprep.subr.bf16.mxu0 0
        %1728 = vmatpush1.bf16.msra.mxu0 0
        %1729 = vmatprep.subr.bf16.mxu0 0
        %1730 = vmatpush1.bf16.msra.mxu0 0
        %1731 = vmatprep.subr.bf16.mxu0 0
        %1732 = vmatpush1.bf16.msra.mxu0 0
        %1733 = vmatprep.subr.bf16.mxu0 %v1541
        %1734 = vmatpush1.bf16.msra.mxu0 %v1526
        %1735 = vmatprep.subr.bf16.mxu0 %v1538
        %1736 = vmatpush1.bf16.msra.mxu0 %v1525
        %1737 = vmatprep.subr.bf16.mxu0 %v1535
        %1738 = vmatpush1.bf16.msra.mxu0 %v1524
        %1739 = vmatprep.subr.bf16.mxu0 %v1532
        %1740 = vmatpush1.bf16.msra.mxu0 %v1523
        %1741 = vmatprep.subr.bf16.mxu0 0
        %1742 = vmatpush2.bf16.msra.mxu0 0
        %1743 = vmatprep.subr.bf16.mxu0 0
        %1744 = vmatpush2.bf16.msra.mxu0 0
        %1745 = vmatprep.subr.bf16.mxu0 0
        %1746 = vmatpush2.bf16.msra.mxu0 0
        %1747 = vmatprep.subr.bf16.mxu0 0
        %1748 = vmatpush2.bf16.msra.mxu0 0
        %1749 = vmatprep.subr.bf16.mxu0 0
        %1750 = vmatpush2.bf16.msra.mxu0 0
        %1751 = vmatprep.subr.bf16.mxu0 0
        %1752 = vmatpush2.bf16.msra.mxu0 0
        %1753 = vmatprep.subr.bf16.mxu0 0
        %1754 = vmatpush2.bf16.msra.mxu0 0
        %1755 = vmatprep.subr.bf16.mxu0 0
        %1756 = vmatpush2.bf16.msra.mxu0 0
        %1757 = vmatprep.mubr.bf16.mxu0 0
        %1758 = vmatmul.mubr.bf16.gmra.mxu0 %v1614
        %v1759 = vpop.f32.mrf.mxu0
        %v1760 = vadd.f32 %v1707, %v1759
        %v1761 = vpop.f32.mrf.mxu0
        %v1762 = vadd.f32 %v1709, %v1761
        %v1763 = vpop.f32.mrf.mxu0
        %v1764 = vadd.f32 %v1711, %v1763
        %v1765 = vpop.f32.mrf.mxu0
        %v1766 = vadd.f32 %v1713, %v1765
        %1767 = vmatprep.mubr.bf16.mxu0 0
        %1768 = vmatmul.mubr.bf16.gmra.mxu0 %v1617
        %v1769 = vpop.f32.mrf.mxu0
        %v1770 = vadd.f32 %v1717, %v1769
        %v1771 = vpop.f32.mrf.mxu0
        %v1772 = vadd.f32 %v1719, %v1771
        %v1773 = vpop.f32.mrf.mxu0
        %v1774 = vadd.f32 %v1721, %v1773
        %v1775 = vpop.f32.mrf.mxu0
        %v1776 = vadd.f32 %v1723, %v1775
        %1777 = vdwg.mxu0
        %v1778 = vmul.f32 %v1760, 0.2
        %v1779 = vmul.f32 %v1762, 0.2
        %v1780 = vmul.f32 %v1764, 0.2
        %v1781 = vmul.f32 %v1766, 0.2
        %v1782 = vmul.f32 %v1770, 0.2
        %v1783 = vmul.f32 %v1772, 0.2
        %v1784 = vmul.f32 %v1774, 0.2
        %v1785 = vmul.f32 %v1776, 0.2
        %v1786 = vmax.f32 %v1760, %v1778
        %v1787 = vmax.f32 %v1762, %v1779
        %v1788 = vmax.f32 %v1764, %v1780
        %v1789 = vmax.f32 %v1766, %v1781
        %v1790 = vmax.f32 %v1770, %v1782
        %v1791 = vmax.f32 %v1772, %v1783
        %v1792 = vmax.f32 %v1774, %v1784
        %v1793 = vmax.f32 %v1776, %v1785
        %v1794 = vpack.c.bf16 %v1788, %v1786
        %v1795 = vpack.c.bf16 %v1789, %v1787
        %v1796 = vpack.c.bf16 %v1792, %v1790
        %v1797 = vpack.c.bf16 %v1793, %v1791
        %v1798 = vld [vmem:[%s3] sm:$0xff]
        %v1799 = vld [vmem:[%s3 + $0x8] sm:$0xf]
        %v1800 = vld [vmem:[%s6] sm:$0xff]
        %1805 = vrot.lane.b32.xlu0 %v1794, 1
        %v1806 = vpop.permute.xlu0 %1805
        %1807 = vrot.lane.b32.xlu0 %v1795, 1
        %v1808 = vpop.permute.xlu0 %1807
        %1809 = vrot.lane.b32.xlu0 %v1796, 1
        %v1810 = vpop.permute.xlu0 %1809
        %1811 = vrot.lane.b32.xlu0 %v1797, 1
        %v1812 = vpop.permute.xlu0 %1811
        %v1813 = vsel %vm434, %v1806, %v1808
        %v1814 = vsel %vm434, %v1810, %v1812
        %v1818 = vsel %vm443, 0, %v1806
        %v1821 = vsel %vm443, 0, %v1810
        %v1823 = vsel %vm471, %v1818, 0
        %v1824 = vsel %vm472, %v1813, 0
        %v1825 = vsel %vm471, %v1821, 0
        %v1826 = vsel %vm472, %v1814, 0
        %1827 = vrot.lane.b32.xlu0 %v1794, 127
        %v1828 = vpop.permute.xlu0 %1827
        %1829 = vrot.lane.b32.xlu0 %v1795, 127
        %v1830 = vpop.permute.xlu0 %1829
        %1831 = vrot.lane.b32.xlu0 %v1796, 127
        %v1832 = vpop.permute.xlu0 %1831
        %1833 = vrot.lane.b32.xlu0 %v1797, 127
        %v1834 = vpop.permute.xlu0 %1833
        %v1835 = vsel %vm497, %v1828, %v1830
        %v1836 = vsel %vm497, %v1832, %v1834
        %v1840 = vsel %vm506, %v1830, 0
        %v1843 = vsel %vm506, %v1834, 0
        %v1845 = vsel %vm533, %v1835, 0
        %v1846 = vsel %vm534, %v1840, 0
        %v1847 = vsel %vm533, %v1836, 0
        %v1848 = vsel %vm534, %v1843, 0
        %1853 = vrot.lane.b32.xlu0 %v1823, 16
        %v1854 = vpop.permute.xlu0 %1853
        %1855 = vrot.lane.b32.xlu0 %v1824, 16
        %v1856 = vpop.permute.xlu0 %1855
        %1857 = vrot.lane.b32.xlu0 %v1825, 16
        %v1858 = vpop.permute.xlu0 %1857
        %1859 = vrot.lane.b32.xlu0 %v1826, 16
        %v1860 = vpop.permute.xlu0 %1859
        %v1861 = vsel %vm567, %v1854, %v1856
        %v1862 = vsel %vm567, %v1858, %v1860
        %v1866 = vsel %vm576, 0, %v1854
        %v1869 = vsel %vm576, 0, %v1858
        %1871 = vrot.lane.b32.xlu0 %v1794, 16
        %v1872 = vpop.permute.xlu0 %1871
        %1873 = vrot.lane.b32.xlu0 %v1795, 16
        %v1874 = vpop.permute.xlu0 %1873
        %1875 = vrot.lane.b32.xlu0 %v1796, 16
        %v1876 = vpop.permute.xlu0 %1875
        %1877 = vrot.lane.b32.xlu0 %v1797, 16
        %v1878 = vpop.permute.xlu0 %1877
        %v1879 = vsel %vm567, %v1872, %v1874
        %v1880 = vsel %vm567, %v1876, %v1878
        %v1884 = vsel %vm576, 0, %v1872
        %v1887 = vsel %vm576, 0, %v1876
        %1893 = vrot.lane.b32.xlu0 %v1845, 16
        %v1894 = vpop.permute.xlu0 %1893
        %1895 = vrot.lane.b32.xlu0 %v1846, 16
        %v1896 = vpop.permute.xlu0 %1895
        %1897 = vrot.lane.b32.xlu0 %v1847, 16
        %v1898 = vpop.permute.xlu0 %1897
        %1899 = vrot.lane.b32.xlu0 %v1848, 16
        %v1900 = vpop.permute.xlu0 %1899
        %v1901 = vsel %vm567, %v1894, %v1896
        %v1902 = vsel %vm567, %v1898, %v1900
        %v1906 = vsel %vm576, 0, %v1894
        %v1909 = vsel %vm576, 0, %v1898
        %1911 = vrot.lane.b32.xlu0 %v1823, 112
        %v1912 = vpop.permute.xlu0 %1911
        %1913 = vrot.lane.b32.xlu0 %v1824, 112
        %v1914 = vpop.permute.xlu0 %1913
        %1915 = vrot.lane.b32.xlu0 %v1825, 112
        %v1916 = vpop.permute.xlu0 %1915
        %1917 = vrot.lane.b32.xlu0 %v1826, 112
        %v1918 = vpop.permute.xlu0 %1917
        %v1919 = vsel %vm685, %v1912, %v1914
        %v1920 = vsel %vm685, %v1916, %v1918
        %v1924 = vsel %vm694, %v1914, 0
        %v1927 = vsel %vm694, %v1918, 0
        %1929 = vrot.lane.b32.xlu0 %v1794, 112
        %v1930 = vpop.permute.xlu0 %1929
        %1931 = vrot.lane.b32.xlu0 %v1795, 112
        %v1932 = vpop.permute.xlu0 %1931
        %1933 = vrot.lane.b32.xlu0 %v1796, 112
        %v1934 = vpop.permute.xlu0 %1933
        %1935 = vrot.lane.b32.xlu0 %v1797, 112
        %v1936 = vpop.permute.xlu0 %1935
        %v1937 = vsel %vm685, %v1930, %v1932
        %v1938 = vsel %vm685, %v1934, %v1936
        %v1942 = vsel %vm694, %v1932, 0
        %v1945 = vsel %vm694, %v1936, 0
        %1947 = vrot.lane.b32.xlu0 %v1845, 112
        %v1948 = vpop.permute.xlu0 %1947
        %1949 = vrot.lane.b32.xlu0 %v1846, 112
        %v1950 = vpop.permute.xlu0 %1949
        %1951 = vrot.lane.b32.xlu0 %v1847, 112
        %v1952 = vpop.permute.xlu0 %1951
        %1953 = vrot.lane.b32.xlu0 %v1848, 112
        %v1954 = vpop.permute.xlu0 %1953
        %v1955 = vsel %vm685, %v1948, %v1950
        %v1956 = vsel %vm685, %v1952, %v1954
        %v1960 = vsel %vm694, %v1950, 0
        %v1963 = vsel %vm694, %v1954, 0
        %1966 = vset.pattern.permute.xlu0 0
        %1967 = vperm.xlu0 %1966, %v1800
        %v1968 = vpop.permute.xlu0 %1967
        %v1972 = vunpack.c.l.b16 %v1798
        %v1973 = vunpack.c.h.b16 %v1798
        %v1974 = vunpack.c.l.b16 %v1799
        %v1975 = vpack.c.b16 %v1972, %v1972
        %v1976 = vpack.c.b16 %v1973, %v1973
        %v1977 = vpack.c.b16 %v1974, %v1974
        %vm1980 = vcmask 261120
        %v1982 = vsel %vm1980, %v1977, 0
        %1984 = vmatprep.subr.bf16.mxu0 %v1826
        %1985 = vmatpush1.bf16.msra.mxu0 %v1825
        %1986 = vmatprep.subr.bf16.mxu0 %v1824
        %1987 = vmatpush1.bf16.msra.mxu0 %v1823
        %1988 = vmatprep.subr.bf16.mxu0 %v1902
        %1989 = vmatpush1.bf16.msra.mxu0 %v1909
        %1990 = vmatprep.subr.bf16.mxu0 %v1901
        %1991 = vmatpush1.bf16.msra.mxu0 %v1906
        %1992 = vmatprep.subr.bf16.mxu0 %v1880
        %1993 = vmatpush1.bf16.msra.mxu0 %v1887
        %1994 = vmatprep.subr.bf16.mxu0 %v1879
        %1995 = vmatpush1.bf16.msra.mxu0 %v1884
        %1996 = vmatprep.subr.bf16.mxu0 %v1862
        %1997 = vmatpush1.bf16.msra.mxu0 %v1869
        %1998 = vmatprep.subr.bf16.mxu0 %v1861
        %1999 = vmatpush1.bf16.msra.mxu0 %v1866
        %2000 = vmatprep.subr.bf16.mxu0 %v1945
        %2001 = vmatpush2.bf16.msra.mxu0 %v1938
        %2002 = vmatprep.subr.bf16.mxu0 %v1942
        %2003 = vmatpush2.bf16.msra.mxu0 %v1937
        %2004 = vmatprep.subr.bf16.mxu0 %v1927
        %2005 = vmatpush2.bf16.msra.mxu0 %v1920
        %2006 = vmatprep.subr.bf16.mxu0 %v1924
        %2007 = vmatpush2.bf16.msra.mxu0 %v1919
        %2008 = vmatprep.subr.bf16.mxu0 %v1848
        %2009 = vmatpush2.bf16.msra.mxu0 %v1847
        %2010 = vmatprep.subr.bf16.mxu0 %v1846
        %2011 = vmatpush2.bf16.msra.mxu0 %v1845
        %2012 = vmatprep.subr.bf16.mxu0 %v1797
        %2013 = vmatpush2.bf16.msra.mxu0 %v1796
        %2014 = vmatprep.subr.bf16.mxu0 %v1795
        %2015 = vmatpush2.bf16.msra.mxu0 %v1794
        %2016 = vmatprep.mubr.bf16.mxu0 %v1976
        %2017 = vmatmul.mubr.bf16.gmra.mxu0 %v1975
        %v2018 = vpop.f32.mrf.mxu0
        %v2019 = vadd.f32 %v1968, %v2018
        %v2020 = vpop.f32.mrf.mxu0
        %v2021 = vadd.f32 %v1968, %v2020
        %v2022 = vpop.f32.mrf.mxu0
        %v2023 = vpop.f32.mrf.mxu0
        %2024 = vdwg.mxu0
        %2025 = vmatprep.subr.bf16.mxu0 0
        %2026 = vmatpush1.bf16.msra.mxu0 0
        %2027 = vmatprep.subr.bf16.mxu0 0
        %2028 = vmatpush1.bf16.msra.mxu0 0
        %2029 = vmatprep.subr.bf16.mxu0 0
        %2030 = vmatpush1.bf16.msra.mxu0 0
        %2031 = vmatprep.subr.bf16.mxu0 0
        %2032 = vmatpush1.bf16.msra.mxu0 0
        %2033 = vmatprep.subr.bf16.mxu0 0
        %2034 = vmatpush1.bf16.msra.mxu0 0
        %2035 = vmatprep.subr.bf16.mxu0 0
        %2036 = vmatpush1.bf16.msra.mxu0 0
        %2037 = vmatprep.subr.bf16.mxu0 %v1963
        %2038 = vmatpush1.bf16.msra.mxu0 %v1956
        %2039 = vmatprep.subr.bf16.mxu0 %v1960
        %2040 = vmatpush1.bf16.msra.mxu0 %v1955
        %2041 = vmatprep.subr.bf16.mxu0 0
        %2042 = vmatpush2.bf16.msra.mxu0 0
        %2043 = vmatprep.subr.bf16.mxu0 0
        %2044 = vmatpush2.bf16.msra.mxu0 0
        %2045 = vmatprep.subr.bf16.mxu0 0
        %2046 = vmatpush2.bf16.msra.mxu0 0
        %2047 = vmatprep.subr.bf16.mxu0 0
        %2048 = vmatpush2.bf16.msra.mxu0 0
        %2049 = vmatprep.subr.bf16.mxu0 0
        %2050 = vmatpush2.bf16.msra.mxu0 0
        %2051 = vmatprep.subr.bf16.mxu0 0
        %2052 = vmatpush2.bf16.msra.mxu0 0
        %2053 = vmatprep.subr.bf16.mxu0 0
        %2054 = vmatpush2.bf16.msra.mxu0 0
        %2055 = vmatprep.subr.bf16.mxu0 0
        %2056 = vmatpush2.bf16.msra.mxu0 0
        %2057 = vmatprep.mubr.bf16.mxu0 0
        %2058 = vmatmul.mubr.bf16.gmra.mxu0 %v1982
        %v2059 = vpop.f32.mrf.mxu0
        %v2060 = vadd.f32 %v2019, %v2059
        %v2061 = vpop.f32.mrf.mxu0
        %v2062 = vadd.f32 %v2021, %v2061
        %v2063 = vpop.f32.mrf.mxu0
        %v2064 = vpop.f32.mrf.mxu0
        %2065 = vdwg.mxu0
        %v2068 = vcombine.low %v2060, %v2062
        %v2070 = vunpack.c.l.s4 1966171168
        %v2071 = vunpack.c.0.s8 %v2070
        %v2072 = vlaneseq
        %v2073 = vshrl.u32 %v2072, 7
        %v2074 = vsub.s32 %v2071, %v2073
        %v2075 = vrot.slane %v2068, %v2074
        %v2077 = vunpack.c.l.s4 1966171168
        %v2078 = vunpack.c.0.s8 %v2077
        %v2079 = vlaneseq
        %v2080 = vshrl.u32 %v2079, 7
        %v2081 = vsub.s32 %v2078, %v2080
        %v2082 = vrot.slane %v2075, %v2081
        %v2084 = vlaneseq
        %vm2085 = vcmp.ge.s32.totalorder %v2084, 0
        %vm2086 = vcmp.lt.s32.totalorder %v2084, 256
        %vm2087 = vmand %vm2085, %vm2086
        %2088 = vst.msk [vmem:[%s311] sm:$0x3] %vm2087, %v2082
        %s2089 = sand.u32 %s185, 1
        %s2090 = scalar_lea.sflag [#allocation4], %s2089
        %s2091 = sand.u32 %s185, 1
        %s2092 = smul.addr %s2091, 2
        %s2093 = scalar_lea.vmem [#allocation7], %s2092
        // Predicated region
        $region57: #{tpu_custom_call.1} parent=47 // pred_check
          %p2094 = pneg %p195
        $region58: #{tpu_custom_call.1} parent=47 // pred_check_branch
          %2096 = sbr.rel (%p2094) target = $region60
        $region59: #{tpu_custom_call.1} parent=47 // pred_region
          %s2098 = ssub.s32 32, 32
          %2099 = vsyncadd %s2090, %s2098
          %s2100 = smul.addr %s25, 2
          %s2101 = smul.addr %s2100, 16
          %s2102 = scalar_lea.hbm %s7, %s2101
          %s2104 = sshll.u32 %s2093, 4
          %s2105 = int_to_ptr.vmem [resolvable:$true] %s2104
          %2107 = dma.vmem_to_hbm [thread:$0]  %s2105, 32, %s2102, %s2090
        $region60: #{tpu_custom_call.1} parent=47 // pred_fallthru
          _
      $region48: #{tpu_custom_call.1} parent=5 // pred_fallthru
        _
      %p2108 = scmp.le.s32.totalorder 2, %s20
      // Predicated region
      $region61: #{tpu_custom_call.1} parent=5 // pred_check
        %p2109 = pneg %p2108
      $region62: #{tpu_custom_call.1} parent=5 // pred_check_branch
        %2111 = sbr.rel (%p2109) target = $region64
      $region63: #{tpu_custom_call.1} parent=5 // pred_region
        %s2112 = ssub.s32 %s20, 2
        // Predicated region
        $region65: #{tpu_custom_call.1} parent=63 // pred_check
          %p2113 = pneg %p201
        $region66: #{tpu_custom_call.1} parent=63 // pred_check_branch
          %2115 = sbr.rel (%p2113) target = $region68
        $region67: #{tpu_custom_call.1} parent=63 // pred_region
          %s2116 = sand.u32 %s186, 1
          %s2117 = scalar_lea.sflag [#allocation4], %s2116
          %s2118 = sand.u32 %s186, 1
          %s2119 = smul.addr %s2118, 2
          %s2120 = scalar_lea.vmem [#allocation7], %s2119
          %2121 = dma.done %s2117, 32
        $region68: #{tpu_custom_call.1} parent=63 // pred_fallthru
          _
      $region64: #{tpu_custom_call.1} parent=5 // pred_fallthru
        _
    $region6: #{tpu_custom_call.1} parent=1 // loop_footer
      %s24 = sadd.s32 1, %s20
    $region7: #{tpu_custom_call.1} parent=1 // loop_footer_branch
      %19 = sbr.rel target = $region3
    $region8: #{tpu_custom_call.1} parent=1 // loop_exit
      _
    %2122 = vsyncpa [#allocation3], 1
    %s2123 = scalar_lea.sflag [#allocation3], 1
    %2124 = vsyncpa %s2123, 1
    %2125 = vsyncpa [#allocation6], 1
    %2126 = vsyncpa [#allocation4], 1
    %s2127 = scalar_lea.sflag [#allocation4], 1
    %2128 = vsyncpa %s2127, 1

</llo_original>
